<compile_context>
chip_gen: v5e
topology: v5e:2x2
jax: 0.10.0
libtpu: 0.0.40
codegen_flags: <defaults>
</compile_context>

<pallas_src>
import functools

import jax
import jax.numpy as jnp
from jax.experimental import pallas as pl
from jax.experimental.pallas import tpu as pltpu


# ---------------------------------------------------------------------------
# Generation-dependent knobs
# ---------------------------------------------------------------------------

def _device_kind():
    try:
        return jax.devices()[0].device_kind.lower()
    except Exception:
        return ""


def _elementwise_dtype():
    kind = _device_kind()
    # v6e / v7x have a bf16 VPU path; v5e and older do not -> keep f32 there.
    if ("v6" in kind) or ("v7" in kind) or ("7x" in kind):
        return jnp.bfloat16
    return jnp.float32


def _vmem_limit_bytes():
    kind = _device_kind()
    if ("v7" in kind) or ("7x" in kind):
        return 48 * 1024 * 1024          # v7x: 64 MiB physical per core
    if ("v5" in kind) or ("v6" in kind):
        return 100 * 1024 * 1024         # v5e/v5p/v6e: 128 MiB physical
    return None                          # unknown: leave default scoped limit


# ---------------------------------------------------------------------------
# Kernel
# ---------------------------------------------------------------------------

def _pointnet_kernel(x_ref, w1_ref, wc_ref, bc_ref, w5_ref, b5_ref,
                     wl1_ref, b6_ref, wl2_ref, bl2_ref,
                     o_ref, acc_ref, *, ew_dtype):
    # x_ref : (Bb, Tn, 8) bf16      -- one batch block x one point tile
    # w1_ref: (8, 128)   bf16       -- conv1 (BN scale folded in)
    # wc_ref: (3, 128, 128) bf16    -- conv2..conv4 (BN scale folded in)
    # bc_ref: (4, 1, 128) f32       -- folded BN biases for conv1..conv4
    # w5_ref: (128, Ep) bf16, b5_ref: (1, Ep) f32
    # wl1_ref: (Ep, 512) bf16 (bn6 scale folded), b6_ref: (1, 512) f32
    # wl2_ref: (512, NCp) bf16, bl2_ref: (1, NCp) f32
    # o_ref : (Bb, NCp) f32 output block (resident across the point axis)
    # acc_ref: (Bb, Ep) f32 running-max scratch
    j = pl.program_id(1)
    bb, tn, cin = x_ref.shape

    def layer(h, w, b):
        # k=1 Conv1d + folded BN scale == bf16 MXU matmul with f32 accumulate;
        # bias + ReLU on the VPU in ew_dtype (bf16 on v6e/v7x, f32 on v5e).
        y = jnp.dot(h.astype(jnp.bfloat16), w,
                    preferred_element_type=jnp.float32).astype(ew_dtype)
        return jnp.maximum(y + b.astype(ew_dtype), 0)

    h = x_ref[...].reshape(bb * tn, cin)            # (Bb*Tn, 8) bf16
    h = layer(h, w1_ref[...], bc_ref[0])            # conv1: 3(8)  -> 64(128)
    h = layer(h, wc_ref[0],  bc_ref[1])             # conv2: 64    -> 64
    h = layer(h, wc_ref[1],  bc_ref[2])             # conv3: 64    -> 64
    h = layer(h, wc_ref[2],  bc_ref[3])             # conv4: 64    -> 128
    h = layer(h, w5_ref[...], b5_ref[...])          # conv5: 128   -> Ep

    # adaptive_max_pool1d(x, 1): running global max over the point axis.
    ep = h.shape[-1]
    part = jnp.max(h.reshape(bb, tn, ep), axis=1).astype(jnp.float32)   # (Bb, Ep)

    @pl.when(j == 0)
    def _():
        # ReLU output is >= 0, so zero-init is exactly the global max-pool.
        acc_ref[...] = jnp.zeros_like(acc_ref)

    acc_ref[...] = jnp.maximum(acc_ref[...], part)

    # Head runs once per batch block, after the last point tile.
    @pl.when(j == pl.num_programs(1) - 1)
    def _():
        pooled = acc_ref[...].astype(jnp.bfloat16)                  # (Bb, Ep)
        g = jnp.dot(pooled, wl1_ref[...],
                    preferred_element_type=jnp.float32).astype(ew_dtype)
        g = jnp.maximum(g + b6_ref[...].astype(ew_dtype), 0)        # (Bb, 512)
        # TODO(synk): dropout (p=0.5) is eval-mode identity.
        out = jnp.dot(g.astype(jnp.bfloat16), wl2_ref[...],
                      preferred_element_type=jnp.float32) + bl2_ref[...]
        o_ref[...] = out.astype(o_ref.dtype)                        # (Bb, 128)


# ---------------------------------------------------------------------------
# Parameter prep: fold BN, pad to lane width, pack, cast weights to bf16
# ---------------------------------------------------------------------------

def _round_up(x, m):
    return (x + m - 1) // m * m


def _pad_to(a, shape):
    return jnp.pad(a, [(0, t - s) for s, t in zip(a.shape, shape)])


def _fold_bn(w, gamma, beta, mean, var, eps=1e-5):
    # Eval-mode BN folded into the matmul weight (in f32, cast later) + bias.
    scale = gamma / jnp.sqrt(var + eps)
    return w * scale[None, :], beta - mean * scale


def _prep_params(params):
    conv_w, conv_b = [], []
    for (w, gamma, beta, mean, var) in params["conv"]:
        wf, bf = _fold_bn(w, gamma, beta, mean, var)
        conv_w.append(wf)
        conv_b.append(bf)

    C = 128
    cin_p = 8                                    # input channels 3 -> 8
    ep = _round_up(conv_w[4].shape[1], 128)      # embedding, lane-padded
    ncp = _round_up(params["wl2"].shape[1], 128) # num_classes -> 128

    w1 = _pad_to(conv_w[0], (cin_p, C)).astype(jnp.bfloat16)
    wc = jnp.stack([_pad_to(conv_w[k], (C, C)) for k in (1, 2, 3)]).astype(jnp.bfloat16)
    bc = jnp.stack([_pad_to(conv_b[k][None, :], (1, C)) for k in (0, 1, 2, 3)])
    w5 = _pad_to(conv_w[4], (C, ep)).astype(jnp.bfloat16)
    b5 = _pad_to(conv_b[4][None, :], (1, ep))

    wl1f, b6f = _fold_bn(params["wl1"], *params["bn6"])
    wl1 = _pad_to(wl1f, (ep, 512)).astype(jnp.bfloat16)
    b6 = b6f[None, :]
    wl2 = _pad_to(params["wl2"], (512, ncp)).astype(jnp.bfloat16)
    bl2 = _pad_to(params["bl2"][None, :], (1, ncp))

    kparams = (w1, wc, bc, w5, b5, wl1, b6, wl2, bl2)
    return kparams, cin_p, ep, ncp


# ---------------------------------------------------------------------------
# Wrapper
# ---------------------------------------------------------------------------

def pointnet_forward(x_bnc, params, *, block_b=8, point_tile=None):
    """x_bnc: (B, N, 3) float32.  Returns (B, num_classes) float32."""
    B, N, _ = x_bnc.shape
    num_classes = params["wl2"].shape[-1]

    if point_tile is None:
        point_tile = N
        for cand in (512, 256, 128, 64, 32, 16):
            if N % cand == 0:
                point_tile = cand
                break
    assert B % block_b == 0, "batch must be divisible by block_b"
    assert N % point_tile == 0, "N must be divisible by point_tile"
    assert point_tile % 8 == 0, "point_tile must be a multiple of 8 (prefer 16)"

    kparams, cin_p, ep, ncp = _prep_params(params)

    # bf16 input halves the strided HBM->VMEM DMA of the lane-padded (rows, 8)
    # block; matmul operands are cast to bf16 anyway so accuracy is unchanged.
    x = _pad_to(x_bnc.astype(jnp.bfloat16), (B, N, cin_p))

    in_specs = [pl.BlockSpec((block_b, point_tile, cin_p), lambda i, j: (i, j, 0))]
    for p in kparams:
        # Whole-array, constant-index blocks: fetched once, stay VMEM-resident.
        in_specs.append(pl.BlockSpec(p.shape, lambda i, j, _nd=p.ndim: (0,) * _nd))

    out_spec = pl.BlockSpec((block_b, ncp), lambda i, j: (i, 0))  # same block over j

    kernel = functools.partial(_pointnet_kernel, ew_dtype=_elementwise_dtype())
    fn = pl.pallas_call(
        kernel,
        out_shape=jax.ShapeDtypeStruct((B, ncp), jnp.float32),
        grid_spec=pltpu.PrefetchScalarGridSpec(
            num_scalar_prefetch=0,
            grid=(B // block_b, N // point_tile),
            in_specs=in_specs,
            out_specs=out_spec,
            scratch_shapes=[pltpu.VMEM((block_b, ep), jnp.float32)],
        ),
        compiler_params=pltpu.CompilerParams(
            dimension_semantics=("parallel", "arbitrary"),
            vmem_limit_bytes=_vmem_limit_bytes(),
        ),
    )
    out_padded = fn(x, *kparams)
    return out_padded[:, :num_classes]


# ---------------------------------------------------------------------------
# Synthetic parameters matching PointNet_main.__init__ shapes
# ---------------------------------------------------------------------------

def make_params(key, embedding=128, num_classes=15):
    dims = [(3, 64), (64, 64), (64, 64), (64, 128), (128, embedding)]
    ks = iter(jax.random.split(key, 40))

    def bn_stats(k, c):
        k1, k2, k3, k4 = jax.random.split(k, 4)
        gamma = 1.0 + 0.1 * jax.random.normal(k1, (c,), jnp.float32)
        beta = 0.1 * jax.random.normal(k2, (c,), jnp.float32)
        mean = 0.05 * jax.random.normal(k3, (c,), jnp.float32)
        var = jnp.abs(jax.random.normal(k4, (c,), jnp.float32)) + 0.5
        return gamma, beta, mean, var

    conv = []
    for cin, cout in dims:
        w = jax.random.normal(next(ks), (cin, cout), jnp.float32) * 0.1
        conv.append((w,) + bn_stats(next(ks), cout))

    wl1 = jax.random.normal(next(ks), (embedding, 512), jnp.float32) * 0.05
    bn6 = bn_stats(next(ks), 512)
    wl2 = jax.random.normal(next(ks), (512, num_classes), jnp.float32) * 0.05
    bl2 = 0.1 * jax.random.normal(next(ks), (num_classes,), jnp.float32)

    return {"conv": conv, "wl1": wl1, "bn6": bn6, "wl2": wl2, "bl2": bl2}


# ---------------------------------------------------------------------------
# Pure-JAX f32 reference (PyTorch eval-mode semantics)
# ---------------------------------------------------------------------------

def reference_forward(x_bnc, params, eps=1e-5):
    h = x_bnc.astype(jnp.float32)
    for (w, gamma, beta, mean, var) in params["conv"]:
        scale = gamma / jnp.sqrt(var + eps)
        h = jnp.maximum(jnp.einsum("bnc,cd->bnd", h, w) * scale
                        + (beta - mean * scale), 0.0)
    pooled = jnp.max(h, axis=1)                                   # adaptive_max_pool1d(., 1)
    gamma, beta, mean, var = params["bn6"]
    scale = gamma / jnp.sqrt(var + eps)
    g = jnp.maximum(pooled @ params["wl1"] * scale + (beta - mean * scale), 0.0)
    # Dropout(0.5) is identity in eval mode.
    return g @ params["wl2"] + params["bl2"]


if __name__ == "__main__":
    key = jax.random.PRNGKey(0)
    kx, kp = jax.random.split(key)

    B, N = 16, 64
    embedding, num_classes = 128, 15

    # PyTorch input would be (B, 3, N); build it and transpose to (B, N, 3).
    x_b3n = jax.random.normal(kx, (B, 3, N), jnp.float32)
    x_bnc = jnp.transpose(x_b3n, (0, 2, 1))

    params = make_params(kp, embedding=embedding, num_classes=num_classes)

    # 2 batch blocks (keeps both v7x TCs busy) x 4 point tiles (exercises the
    # running-max accumulator and the pl.when finalize path).
    out = pointnet_forward(x_bnc, params, block_b=8, point_tile=16)
    out = jax.block_until_ready(out)

    ref = reference_forward(x_bnc, params)
    assert out.shape == (B, num_classes)
    max_err = float(jnp.max(jnp.abs(out - ref)))
    assert jnp.allclose(out, ref, atol=2e-2, rtol=2e-2), (
        f"mismatch vs f32 reference (max err {max_err})")

    print("KERNEL_OK")
</pallas_src>

<mosaic_0001>
module attributes {stable_mosaic.version = 11 : i64} {
  func.func @_pointnet_kernel(%arg0: i32, %arg1: i32, %arg2: memref<8x16x8xbf16, #tpu.memory_space<vmem>>, %arg3: memref<8x128xbf16, #tpu.memory_space<vmem>>, %arg4: memref<3x128x128xbf16, #tpu.memory_space<vmem>>, %arg5: memref<4x1x128xf32, #tpu.memory_space<vmem>>, %arg6: memref<128x128xbf16, #tpu.memory_space<vmem>>, %arg7: memref<1x128xf32, #tpu.memory_space<vmem>>, %arg8: memref<128x512xbf16, #tpu.memory_space<vmem>>, %arg9: memref<1x512xf32, #tpu.memory_space<vmem>>, %arg10: memref<512x128xbf16, #tpu.memory_space<vmem>>, %arg11: memref<1x128xf32, #tpu.memory_space<vmem>>, %arg12: memref<8x128xf32, #tpu.memory_space<vmem>>, %arg13: memref<8x128xf32, #tpu.memory_space<vmem>>) attributes {dimension_semantics = [#tpu.dimension_semantics<parallel>, #tpu.dimension_semantics<arbitrary>], iteration_bounds = array<i64: 2, 4>, scalar_prefetch = 0 : i64, scratch_operands = 1 : i64, tpu.core_type = #tpu.core_type<tc>, window_params = [{transform_indices = @transform_0, window_bounds = array<i64: 8, 16, 8>}, {pipeline_mode = #tpu.pipeline_mode<synchronous>, transform_indices = @transform_1, window_bounds = array<i64: 8, 128>}, {pipeline_mode = #tpu.pipeline_mode<synchronous>, transform_indices = @transform_2, window_bounds = array<i64: 3, 128, 128>}, {pipeline_mode = #tpu.pipeline_mode<synchronous>, transform_indices = @transform_3, window_bounds = array<i64: 4, 1, 128>}, {pipeline_mode = #tpu.pipeline_mode<synchronous>, transform_indices = @transform_4, window_bounds = array<i64: 128, 128>}, {pipeline_mode = #tpu.pipeline_mode<synchronous>, transform_indices = @transform_5, window_bounds = array<i64: 1, 128>}, {pipeline_mode = #tpu.pipeline_mode<synchronous>, transform_indices = @transform_6, window_bounds = array<i64: 128, 512>}, {pipeline_mode = #tpu.pipeline_mode<synchronous>, transform_indices = @transform_7, window_bounds = array<i64: 1, 512>}, {pipeline_mode = #tpu.pipeline_mode<synchronous>, transform_indices = @transform_8, window_bounds = array<i64: 512, 128>}, {pipeline_mode = #tpu.pipeline_mode<synchronous>, transform_indices = @transform_9, window_bounds = array<i64: 1, 128>}, {transform_indices = @transform_10, window_bounds = array<i64: 8, 128>}]} {
    %c0 = arith.constant 0 : index
    %c0_0 = arith.constant 0 : index
    %c0_1 = arith.constant 0 : index
    %0 = vector.load %arg2[%c0, %c0_0, %c0_1] : memref<8x16x8xbf16, #tpu.memory_space<vmem>>, vector<8x16x8xbf16>
    %1 = vector.shape_cast %0 : vector<8x16x8xbf16> to vector<128x8xbf16>
    %c0_2 = arith.constant 0 : index
    %c0_3 = arith.constant 0 : index
    %2 = vector.load %arg3[%c0_2, %c0_3] : memref<8x128xbf16, #tpu.memory_space<vmem>>, vector<8x128xbf16>
    %c0_4 = arith.constant 0 : index
    %c0_5 = arith.constant 0 : index
    %c0_6 = arith.constant 0 : index
    %3 = vector.load %arg5[%c0_4, %c0_5, %c0_6] : memref<4x1x128xf32, #tpu.memory_space<vmem>>, vector<1x1x128xf32>
    %4 = vector.shape_cast %3 : vector<1x1x128xf32> to vector<1x128xf32>
    %cst = arith.constant dense<0.000000e+00> : vector<128x128xf32>
    %5 = tpu.matmul %1, %2, %cst {dimension_numbers = #tpu.dot_dimension_numbers<[1], [0], [0], [1], [0, 0, 1, 1], [], []>} : vector<128x8xbf16>, vector<8x128xbf16>, vector<128x128xf32> -> vector<128x128xf32>
    %6 = vector.broadcast %4 : vector<1x128xf32> to vector<128x128xf32>
    %7 = arith.addf %5, %6 : vector<128x128xf32>
    %cst_7 = arith.constant 0.000000e+00 : f32
    %8 = vector.broadcast %cst_7 : f32 to vector<128x128xf32>
    %9 = arith.maximumf %7, %8 : vector<128x128xf32>
    %c0_8 = arith.constant 0 : index
    %c0_9 = arith.constant 0 : index
    %c0_10 = arith.constant 0 : index
    %10 = vector.load %arg4[%c0_8, %c0_9, %c0_10] : memref<3x128x128xbf16, #tpu.memory_space<vmem>>, vector<1x128x128xbf16>
    %11 = vector.shape_cast %10 : vector<1x128x128xbf16> to vector<128x128xbf16>
    %c1 = arith.constant 1 : index
    %c0_11 = arith.constant 0 : index
    %c0_12 = arith.constant 0 : index
    %12 = vector.load %arg5[%c1, %c0_11, %c0_12] : memref<4x1x128xf32, #tpu.memory_space<vmem>>, vector<1x1x128xf32>
    %13 = vector.shape_cast %12 : vector<1x1x128xf32> to vector<1x128xf32>
    %14 = arith.truncf %9 : vector<128x128xf32> to vector<128x128xbf16>
    %cst_13 = arith.constant dense<0.000000e+00> : vector<128x128xf32>
    %15 = tpu.matmul %14, %11, %cst_13 {dimension_numbers = #tpu.dot_dimension_numbers<[1], [0], [0], [1], [0, 0, 1, 1], [], []>} : vector<128x128xbf16>, vector<128x128xbf16>, vector<128x128xf32> -> vector<128x128xf32>
    %16 = vector.broadcast %13 : vector<1x128xf32> to vector<128x128xf32>
    %17 = arith.addf %15, %16 : vector<128x128xf32>
    %cst_14 = arith.constant 0.000000e+00 : f32
    %18 = vector.broadcast %cst_14 : f32 to vector<128x128xf32>
    %19 = arith.maximumf %17, %18 : vector<128x128xf32>
    %c1_15 = arith.constant 1 : index
    %c0_16 = arith.constant 0 : index
    %c0_17 = arith.constant 0 : index
    %20 = vector.load %arg4[%c1_15, %c0_16, %c0_17] : memref<3x128x128xbf16, #tpu.memory_space<vmem>>, vector<1x128x128xbf16>
    %21 = vector.shape_cast %20 : vector<1x128x128xbf16> to vector<128x128xbf16>
    %c2 = arith.constant 2 : index
    %c0_18 = arith.constant 0 : index
    %c0_19 = arith.constant 0 : index
    %22 = vector.load %arg5[%c2, %c0_18, %c0_19] : memref<4x1x128xf32, #tpu.memory_space<vmem>>, vector<1x1x128xf32>
    %23 = vector.shape_cast %22 : vector<1x1x128xf32> to vector<1x128xf32>
    %24 = arith.truncf %19 : vector<128x128xf32> to vector<128x128xbf16>
    %cst_20 = arith.constant dense<0.000000e+00> : vector<128x128xf32>
    %25 = tpu.matmul %24, %21, %cst_20 {dimension_numbers = #tpu.dot_dimension_numbers<[1], [0], [0], [1], [0, 0, 1, 1], [], []>} : vector<128x128xbf16>, vector<128x128xbf16>, vector<128x128xf32> -> vector<128x128xf32>
    %26 = vector.broadcast %23 : vector<1x128xf32> to vector<128x128xf32>
    %27 = arith.addf %25, %26 : vector<128x128xf32>
    %cst_21 = arith.constant 0.000000e+00 : f32
    %28 = vector.broadcast %cst_21 : f32 to vector<128x128xf32>
    %29 = arith.maximumf %27, %28 : vector<128x128xf32>
    %c2_22 = arith.constant 2 : index
    %c0_23 = arith.constant 0 : index
    %c0_24 = arith.constant 0 : index
    %30 = vector.load %arg4[%c2_22, %c0_23, %c0_24] : memref<3x128x128xbf16, #tpu.memory_space<vmem>>, vector<1x128x128xbf16>
    %31 = vector.shape_cast %30 : vector<1x128x128xbf16> to vector<128x128xbf16>
    %c3 = arith.constant 3 : index
    %c0_25 = arith.constant 0 : index
    %c0_26 = arith.constant 0 : index
    %32 = vector.load %arg5[%c3, %c0_25, %c0_26] : memref<4x1x128xf32, #tpu.memory_space<vmem>>, vector<1x1x128xf32>
    %33 = vector.shape_cast %32 : vector<1x1x128xf32> to vector<1x128xf32>
    %34 = arith.truncf %29 : vector<128x128xf32> to vector<128x128xbf16>
    %cst_27 = arith.constant dense<0.000000e+00> : vector<128x128xf32>
    %35 = tpu.matmul %34, %31, %cst_27 {dimension_numbers = #tpu.dot_dimension_numbers<[1], [0], [0], [1], [0, 0, 1, 1], [], []>} : vector<128x128xbf16>, vector<128x128xbf16>, vector<128x128xf32> -> vector<128x128xf32>
    %36 = vector.broadcast %33 : vector<1x128xf32> to vector<128x128xf32>
    %37 = arith.addf %35, %36 : vector<128x128xf32>
    %cst_28 = arith.constant 0.000000e+00 : f32
    %38 = vector.broadcast %cst_28 : f32 to vector<128x128xf32>
    %39 = arith.maximumf %37, %38 : vector<128x128xf32>
    %c0_29 = arith.constant 0 : index
    %c0_30 = arith.constant 0 : index
    %40 = vector.load %arg6[%c0_29, %c0_30] : memref<128x128xbf16, #tpu.memory_space<vmem>>, vector<128x128xbf16>
    %c0_31 = arith.constant 0 : index
    %c0_32 = arith.constant 0 : index
    %41 = vector.load %arg7[%c0_31, %c0_32] : memref<1x128xf32, #tpu.memory_space<vmem>>, vector<1x128xf32>
    %42 = arith.truncf %39 : vector<128x128xf32> to vector<128x128xbf16>
    %cst_33 = arith.constant dense<0.000000e+00> : vector<128x128xf32>
    %43 = tpu.matmul %42, %40, %cst_33 {dimension_numbers = #tpu.dot_dimension_numbers<[1], [0], [0], [1], [0, 0, 1, 1], [], []>} : vector<128x128xbf16>, vector<128x128xbf16>, vector<128x128xf32> -> vector<128x128xf32>
    %44 = vector.broadcast %41 : vector<1x128xf32> to vector<128x128xf32>
    %45 = arith.addf %43, %44 : vector<128x128xf32>
    %cst_34 = arith.constant 0.000000e+00 : f32
    %46 = vector.broadcast %cst_34 : f32 to vector<128x128xf32>
    %47 = arith.maximumf %45, %46 : vector<128x128xf32>
    %48 = vector.shape_cast %47 : vector<128x128xf32> to vector<8x16x128xf32>
    %cst_35 = arith.constant dense<0xFF800000> : vector<8x128xf32>
    %49 = vector.multi_reduction <maximumf>, %48, %cst_35 [1] : vector<8x16x128xf32> to vector<8x128xf32>
    %c0_i32 = arith.constant 0 : i32
    %50 = arith.cmpi eq, %arg1, %c0_i32 : i32
    %51 = arith.extui %50 : i1 to i32
    %c0_i32_36 = arith.constant 0 : i32
    %52 = arith.cmpi ne, %51, %c0_i32_36 : i32
    scf.if %52 {
      %cst_42 = arith.constant 0.000000e+00 : f32
      %59 = vector.broadcast %cst_42 : f32 to vector<8x128xf32>
      %c0_43 = arith.constant 0 : index
      %c0_44 = arith.constant 0 : index
      %60 = vector.load %arg13[%c0_43, %c0_44] : memref<8x128xf32, #tpu.memory_space<vmem>>, vector<8x128xf32>
      tpu.vector_store %arg13[%c0_43, %c0_44], %59 {strides = array<i32>} : memref<8x128xf32, #tpu.memory_space<vmem>>, vector<8x128xf32>,
    } else {
    }
    %c0_37 = arith.constant 0 : index
    %c0_38 = arith.constant 0 : index
    %53 = vector.load %arg13[%c0_37, %c0_38] : memref<8x128xf32, #tpu.memory_space<vmem>>, vector<8x128xf32>
    %54 = arith.maximumf %53, %49 : vector<8x128xf32>
    %c0_39 = arith.constant 0 : index
    %c0_40 = arith.constant 0 : index
    %55 = vector.load %arg13[%c0_39, %c0_40] : memref<8x128xf32, #tpu.memory_space<vmem>>, vector<8x128xf32>
    tpu.vector_store %arg13[%c0_39, %c0_40], %54 {strides = array<i32>} : memref<8x128xf32, #tpu.memory_space<vmem>>, vector<8x128xf32>,
    %c3_i32 = arith.constant 3 : i32
    %56 = arith.cmpi eq, %arg1, %c3_i32 : i32
    %57 = arith.extui %56 : i1 to i32
    %c0_i32_41 = arith.constant 0 : i32
    %58 = arith.cmpi ne, %57, %c0_i32_41 : i32
    scf.if %58 {
      %c0_42 = arith.constant 0 : index
      %c0_43 = arith.constant 0 : index
      %59 = vector.load %arg13[%c0_42, %c0_43] : memref<8x128xf32, #tpu.memory_space<vmem>>, vector<8x128xf32>
      %60 = arith.truncf %59 : vector<8x128xf32> to vector<8x128xbf16>
      %c0_44 = arith.constant 0 : index
      %c0_45 = arith.constant 0 : index
      %61 = vector.load %arg8[%c0_44, %c0_45] : memref<128x512xbf16, #tpu.memory_space<vmem>>, vector<128x512xbf16>
      %cst_46 = arith.constant dense<0.000000e+00> : vector<8x512xf32>
      %62 = tpu.matmul %60, %61, %cst_46 {dimension_numbers = #tpu.dot_dimension_numbers<[1], [0], [0], [1], [0, 0, 1, 1], [], []>} : vector<8x128xbf16>, vector<128x512xbf16>, vector<8x512xf32> -> vector<8x512xf32>
      %c0_47 = arith.constant 0 : index
      %c0_48 = arith.constant 0 : index
      %63 = vector.load %arg9[%c0_47, %c0_48] : memref<1x512xf32, #tpu.memory_space<vmem>>, vector<1x512xf32>
      %64 = vector.broadcast %63 : vector<1x512xf32> to vector<8x512xf32>
      %65 = arith.addf %62, %64 : vector<8x512xf32>
      %cst_49 = arith.constant 0.000000e+00 : f32
      %66 = vector.broadcast %cst_49 : f32 to vector<8x512xf32>
      %67 = arith.maximumf %65, %66 : vector<8x512xf32>
      %68 = arith.truncf %67 : vector<8x512xf32> to vector<8x512xbf16>
      %c0_50 = arith.constant 0 : index
      %c0_51 = arith.constant 0 : index
      %69 = vector.load %arg10[%c0_50, %c0_51] : memref<512x128xbf16, #tpu.memory_space<vmem>>, vector<512x128xbf16>
      %cst_52 = arith.constant dense<0.000000e+00> : vector<8x128xf32>
      %70 = tpu.matmul %68, %69, %cst_52 {dimension_numbers = #tpu.dot_dimension_numbers<[1], [0], [0], [1], [0, 0, 1, 1], [], []>} : vector<8x512xbf16>, vector<512x128xbf16>, vector<8x128xf32> -> vector<8x128xf32>
      %c0_53 = arith.constant 0 : index
      %c0_54 = arith.constant 0 : index
      %71 = vector.load %arg11[%c0_53, %c0_54] : memref<1x128xf32, #tpu.memory_space<vmem>>, vector<1x128xf32>
      %72 = vector.broadcast %71 : vector<1x128xf32> to vector<8x128xf32>
      %73 = arith.addf %70, %72 : vector<8x128xf32>
      %c0_55 = arith.constant 0 : index
      %c0_56 = arith.constant 0 : index
      %74 = vector.load %arg12[%c0_55, %c0_56] : memref<8x128xf32, #tpu.memory_space<vmem>>, vector<8x128xf32>
      tpu.vector_store %arg12[%c0_55, %c0_56], %73 {strides = array<i32>} : memref<8x128xf32, #tpu.memory_space<vmem>>, vector<8x128xf32>,
    } else {
    }
    return
  }
  func.func @transform_0(%arg0: i32, %arg1: i32) -> (i32, i32, i32) {
    %c0_i32 = arith.constant 0 : i32
    %c0_i32_0 = arith.constant 0 : i32
    return %arg0, %arg1, %c0_i32 : i32, i32, i32
  }
  func.func @transform_1(%arg0: i32, %arg1: i32) -> (i32, i32) {
    %c0_i32 = arith.constant 0 : i32
    %c0_i32_0 = arith.constant 0 : i32
    %c0_i32_1 = arith.constant 0 : i32
    return %c0_i32, %c0_i32_0 : i32, i32
  }
  func.func @transform_2(%arg0: i32, %arg1: i32) -> (i32, i32, i32) {
    %c0_i32 = arith.constant 0 : i32
    %c0_i32_0 = arith.constant 0 : i32
    %c0_i32_1 = arith.constant 0 : i32
    %c0_i32_2 = arith.constant 0 : i32
    return %c0_i32, %c0_i32_0, %c0_i32_1 : i32, i32, i32
  }
  func.func @transform_3(%arg0: i32, %arg1: i32) -> (i32, i32, i32) {
    %c0_i32 = arith.constant 0 : i32
    %c0_i32_0 = arith.constant 0 : i32
    %c0_i32_1 = arith.constant 0 : i32
    %c0_i32_2 = arith.constant 0 : i32
    return %c0_i32, %c0_i32_0, %c0_i32_1 : i32, i32, i32
  }
  func.func @transform_4(%arg0: i32, %arg1: i32) -> (i32, i32) {
    %c0_i32 = arith.constant 0 : i32
    %c0_i32_0 = arith.constant 0 : i32
    %c0_i32_1 = arith.constant 0 : i32
    return %c0_i32, %c0_i32_0 : i32, i32
  }
  func.func @transform_5(%arg0: i32, %arg1: i32) -> (i32, i32) {
    %c0_i32 = arith.constant 0 : i32
    %c0_i32_0 = arith.constant 0 : i32
    %c0_i32_1 = arith.constant 0 : i32
    return %c0_i32, %c0_i32_0 : i32, i32
  }
  func.func @transform_6(%arg0: i32, %arg1: i32) -> (i32, i32) {
    %c0_i32 = arith.constant 0 : i32
    %c0_i32_0 = arith.constant 0 : i32
    %c0_i32_1 = arith.constant 0 : i32
    return %c0_i32, %c0_i32_0 : i32, i32
  }
  func.func @transform_7(%arg0: i32, %arg1: i32) -> (i32, i32) {
    %c0_i32 = arith.constant 0 : i32
    %c0_i32_0 = arith.constant 0 : i32
    %c0_i32_1 = arith.constant 0 : i32
    return %c0_i32, %c0_i32_0 : i32, i32
  }
  func.func @transform_8(%arg0: i32, %arg1: i32) -> (i32, i32) {
    %c0_i32 = arith.constant 0 : i32
    %c0_i32_0 = arith.constant 0 : i32
    %c0_i32_1 = arith.constant 0 : i32
    return %c0_i32, %c0_i32_0 : i32, i32
  }
  func.func @transform_9(%arg0: i32, %arg1: i32) -> (i32, i32) {
    %c0_i32 = arith.constant 0 : i32
    %c0_i32_0 = arith.constant 0 : i32
    %c0_i32_1 = arith.constant 0 : i32
    return %c0_i32, %c0_i32_0 : i32, i32
  }
  func.func @transform_10(%arg0: i32, %arg1: i32) -> (i32, i32) {
    %c0_i32 = arith.constant 0 : i32
    %c0_i32_0 = arith.constant 0 : i32
    return %arg0, %c0_i32 : i32, i32
  }
}

</mosaic_0001>

<llo_original>
// kernel: tpu_custom_call.1
$region0: #{tpu_custom_call.1}
  #allocation0 [shape = 'u32[]', space=smem, size = 0x4, offset = 0x4, fixed_abs, tag = 'smem constant byte address 0x4 - core index']
  #allocation1 [shape = 'u32[72,128]{1,0:T(1,128)}', space=vmem, size = 0x9000, scoped, tag = 'internal scratch']
  #allocation2 [shape = 'f32[8,128]{1,0:T(8,128)}', space=vmem, size = 0x1000, scoped, tag = 'scratch operand']
  %s0 = inlined_call_operand.vmem [shape: bf16[16,64,8], index: 0, kind: input, shape index: {}]
  %s1 = inlined_call_operand.hbm [shape: bf16[8,128], index: 1, kind: input, shape index: {}]
  %s2 = inlined_call_operand.hbm [shape: bf16[3,128,128], index: 2, kind: input, shape index: {}]
  %s3 = inlined_call_operand.hbm [shape: f32[4,1,128], index: 3, kind: input, shape index: {}]
  %s4 = inlined_call_operand.vmem [shape: bf16[128,128], index: 4, kind: input, shape index: {}]
  %s5 = inlined_call_operand.hbm [shape: f32[1,128], index: 5, kind: input, shape index: {}]
  %s6 = inlined_call_operand.vmem [shape: bf16[128,512], index: 6, kind: input, shape index: {}]
  %s7 = inlined_call_operand.vmem [shape: f32[1,512], index: 7, kind: input, shape index: {}]
  %s8 = inlined_call_operand.vmem [shape: bf16[512,128], index: 8, kind: input, shape index: {}]
  %s9 = inlined_call_operand.vmem [shape: f32[1,128], index: 9, kind: input, shape index: {}]
  %s10 = inlined_call_operand.hbm [shape: f32[16,128], index: 10, kind: output, shape index: {}]
  %s11 = sld [smem:[#allocation0]]
  $region138: #{tpu_custom_call.1} parent=0
    _
  %s13 = ssub.s32 1, %s11
  %s14 = scalar_select 0, %s13, %s11
  $region1: #{tpu_custom_call.1} parent=0
    #allocation3 [shape = 'u8[65536]{0}', space=vmem, size = 0x10000, scoped, tag = 'input window, operand 0']
    #allocation4 [shape = 'u8[2048]{0}', space=vmem, size = 0x800, scoped, tag = 'input window, operand 1, single buffered']
    #allocation5 [shape = 's32[2]{0}', space=sflag, size = 0x8, scoped, tag = 'scoped memory for tpu_custom_call.1']
    #allocation6 [shape = 's32[2]{0}', space=sflag, size = 0x8, scoped, tag = 'scoped memory for tpu_custom_call.1']
    #allocation7 [shape = 'u8[98304]{0}', space=vmem, size = 0x18000, scoped, tag = 'input window, operand 2, single buffered']
    #allocation8 [shape = 's32[1]{0}', space=sflag, size = 0x4, scoped, tag = 'scoped memory for tpu_custom_call.1']
    #allocation9 [shape = 'u8[2048]{0}', space=vmem, size = 0x800, scoped, tag = 'input window, operand 3, single buffered']
    #allocation10 [shape = 'u8[512]{0}', space=vmem, size = 0x400, scoped, tag = 'input window, operand 5, single buffered']
    #allocation11 [shape = 's32[1]{0}', space=sflag, size = 0x4, scoped, tag = 'scoped memory for tpu_custom_call.1']
    #allocation12 [shape = 'u8[8192]{0}', space=vmem, size = 0x2000, scoped, tag = 'output window, operand 0']
    %15 = vsyncpa [#allocation5], 0
    %16 = vsyncpa [#allocation8], 0
    %17 = vsyncpa [#allocation11], 0
    %18 = vsyncpa [#allocation6], 0
    %s19 = scalar_lea.sflag [#allocation6], 1
    %20 = vsyncpa %s19, 0
    loop: start=0, step=1, limit=10
    $region2: #{tpu_custom_call.1} parent=1 // loop_pre_header
      _
    $region3: #{tpu_custom_call.1} parent=1 // loop_header
      %s22 = sphi 0, %s26
      %p23 = scmp.ge.s32.totalorder %s22, 10
      %s29 = sphi 0, %s41
      %s30 = sphi 0, %s37
      %s31 = sphi 0, %s29
      %s32 = sphi 0, %s30
      %s33 = sphi 0, %s31
      %s34 = sphi 0, %s32
      %s46 = sphi 0, %s48
      %s49 = sphi 0, %s46
      %s50 = sphi 0, %s49
      %s66 = sphi 0, %s50
      %s70 = sphi 0, %s70
      %s72 = sphi 0, %s70
      %s73 = sphi 0, %s72
      %s87 = sphi 0, %s73
      %s91 = sphi 0, %s91
      %s93 = sphi 0, %s91
      %s94 = sphi 0, %s93
      %s108 = sphi 0, %s94
      %s112 = sphi 0, %s112
      %s114 = sphi 0, %s112
      %s115 = sphi 0, %s114
      %s129 = sphi 0, %s115
      %s133 = sphi 0, %s133
      %s135 = sphi 0, %s133
      %s136 = sphi 0, %s135
      %s150 = sphi 0, %s136
      %s154 = sphi 0, %s154
      %s156 = sphi 0, %s154
      %s157 = sphi 0, %s156
      %s171 = sphi 0, %s157
      %s175 = sphi 0, %s175
      %s177 = sphi 0, %s175
      %s178 = sphi 0, %s177
      %s192 = sphi 0, %s178
      %s196 = sphi 0, %s196
      %s198 = sphi 0, %s196
      %s199 = sphi 0, %s198
      %s213 = sphi 0, %s199
      %s217 = sphi 0, %s217
      %s219 = sphi 0, %s217
      %s220 = sphi 0, %s219
      %s234 = sphi 0, %s220
      %s238 = sphi 0, %s238
      %s240 = sphi 0, %s238
      %s241 = sphi 0, %s240
      %s255 = sphi 0, %s241
      %s261 = sphi 0, %s263
      %s264 = sphi 0, %s261
      %s265 = sphi 0, %s264
      %s281 = sphi 0, %s265
    $region4: #{tpu_custom_call.1} parent=1 // loop_header_branch
      %25 = sbr.rel (%p23) target = $region8
    $region5: #{tpu_custom_call.1} parent=1 // loop_body
      %s27 = ssub.s32 %s22, 1
      %s28 = ssub.s32 %s22, 2
      %s35 = sadd.s32 1, %s30
      %p36 = scmp.ge.s32.totalorder %s35, 4
      %s37 = scalar_select %p36, 0, %s35
      %s38 = sadd.s32 1, %s29
      %s39 = scalar_select %p36, %s38, %s29
      %p40 = scmp.ge.s32.totalorder %s39, 2
      %s41 = scalar_select %p40, 0, %s39
      %s42 = ssub.s32 %s29, %s41
      %s43 = ssub.s32 %s30, %s37
      %s44 = sor.u32 %s42, %s43
      %p45 = scmp.eq.s32.totalorder %s44, 0
      %s47 = sadd.s32 %s46, 1
      %s48 = scalar_select %p45, %s46, %s47
      %p51 = pneg %p45
      %p52 = scmp.eq.s32.totalorder %s22, 7
      %p53 = por %p51, %p52
      %p54 = scmp.ne.s32.totalorder %s46, %s49
      %p55 = scmp.eq.s32.totalorder %s22, 0
      %p56 = por %p54, %p55
      %p57 = scmp.ne.s32.totalorder %s46, %s49
      %p58 = scmp.eq.s32.totalorder %s27, 7
      %p59 = por %p57, %p58
      %p60 = scmp.ne.s32.totalorder %s49, %s50
      %p61 = scmp.eq.s32.totalorder %s27, 0
      %p62 = por %p60, %p61
      %p63 = scmp.ne.s32.totalorder %s49, %s50
      %p64 = scmp.eq.s32.totalorder %s28, 7
      %p65 = por %p63, %p64
      %p67 = scmp.ne.s32.totalorder %s50, %s66
      %p68 = scmp.eq.s32.totalorder %s28, 0
      %p69 = por %p67, %p68
      %s71 = sadd.s32 %s70, 1
      %p74 = scmp.eq.s32.totalorder %s22, 7
      %p75 = scmp.ne.s32.totalorder %s70, %s72
      %p76 = scmp.eq.s32.totalorder %s22, 0
      %p77 = por %p75, %p76
      %p78 = scmp.ne.s32.totalorder %s70, %s72
      %p79 = scmp.eq.s32.totalorder %s27, 7
      %p80 = por %p78, %p79
      %p81 = scmp.ne.s32.totalorder %s72, %s73
      %p82 = scmp.eq.s32.totalorder %s27, 0
      %p83 = por %p81, %p82
      %p84 = scmp.ne.s32.totalorder %s72, %s73
      %p85 = scmp.eq.s32.totalorder %s28, 7
      %p86 = por %p84, %p85
      %p88 = scmp.ne.s32.totalorder %s73, %s87
      %p89 = scmp.eq.s32.totalorder %s28, 0
      %p90 = por %p88, %p89
      %s92 = sadd.s32 %s91, 1
      %p95 = scmp.eq.s32.totalorder %s22, 7
      %p96 = scmp.ne.s32.totalorder %s91, %s93
      %p97 = scmp.eq.s32.totalorder %s22, 0
      %p98 = por %p96, %p97
      %p99 = scmp.ne.s32.totalorder %s91, %s93
      %p100 = scmp.eq.s32.totalorder %s27, 7
      %p101 = por %p99, %p100
      %p102 = scmp.ne.s32.totalorder %s93, %s94
      %p103 = scmp.eq.s32.totalorder %s27, 0
      %p104 = por %p102, %p103
      %p105 = scmp.ne.s32.totalorder %s93, %s94
      %p106 = scmp.eq.s32.totalorder %s28, 7
      %p107 = por %p105, %p106
      %p109 = scmp.ne.s32.totalorder %s94, %s108
      %p110 = scmp.eq.s32.totalorder %s28, 0
      %p111 = por %p109, %p110
      %s113 = sadd.s32 %s112, 1
      %p116 = scmp.eq.s32.totalorder %s22, 7
      %p117 = scmp.ne.s32.totalorder %s112, %s114
      %p118 = scmp.eq.s32.totalorder %s22, 0
      %p119 = por %p117, %p118
      %p120 = scmp.ne.s32.totalorder %s112, %s114
      %p121 = scmp.eq.s32.totalorder %s27, 7
      %p122 = por %p120, %p121
      %p123 = scmp.ne.s32.totalorder %s114, %s115
      %p124 = scmp.eq.s32.totalorder %s27, 0
      %p125 = por %p123, %p124
      %p126 = scmp.ne.s32.totalorder %s114, %s115
      %p127 = scmp.eq.s32.totalorder %s28, 7
      %p128 = por %p126, %p127
      %p130 = scmp.ne.s32.totalorder %s115, %s129
      %p131 = scmp.eq.s32.totalorder %s28, 0
      %p132 = por %p130, %p131
      %s134 = sadd.s32 %s133, 1
      %p137 = scmp.eq.s32.totalorder %s22, 7
      %p138 = scmp.ne.s32.totalorder %s133, %s135
      %p139 = scmp.eq.s32.totalorder %s22, 0
      %p140 = por %p138, %p139
      %p141 = scmp.ne.s32.totalorder %s133, %s135
      %p142 = scmp.eq.s32.totalorder %s27, 7
      %p143 = por %p141, %p142
      %p144 = scmp.ne.s32.totalorder %s135, %s136
      %p145 = scmp.eq.s32.totalorder %s27, 0
      %p146 = por %p144, %p145
      %p147 = scmp.ne.s32.totalorder %s135, %s136
      %p148 = scmp.eq.s32.totalorder %s28, 7
      %p149 = por %p147, %p148
      %p151 = scmp.ne.s32.totalorder %s136, %s150
      %p152 = scmp.eq.s32.totalorder %s28, 0
      %p153 = por %p151, %p152
      %s155 = sadd.s32 %s154, 1
      %p158 = scmp.eq.s32.totalorder %s22, 7
      %p159 = scmp.ne.s32.totalorder %s154, %s156
      %p160 = scmp.eq.s32.totalorder %s22, 0
      %p161 = por %p159, %p160
      %p162 = scmp.ne.s32.totalorder %s154, %s156
      %p163 = scmp.eq.s32.totalorder %s27, 7
      %p164 = por %p162, %p163
      %p165 = scmp.ne.s32.totalorder %s156, %s157
      %p166 = scmp.eq.s32.totalorder %s27, 0
      %p167 = por %p165, %p166
      %p168 = scmp.ne.s32.totalorder %s156, %s157
      %p169 = scmp.eq.s32.totalorder %s28, 7
      %p170 = por %p168, %p169
      %p172 = scmp.ne.s32.totalorder %s157, %s171
      %p173 = scmp.eq.s32.totalorder %s28, 0
      %p174 = por %p172, %p173
      %s176 = sadd.s32 %s175, 1
      %p179 = scmp.eq.s32.totalorder %s22, 7
      %p180 = scmp.ne.s32.totalorder %s175, %s177
      %p181 = scmp.eq.s32.totalorder %s22, 0
      %p182 = por %p180, %p181
      %p183 = scmp.ne.s32.totalorder %s175, %s177
      %p184 = scmp.eq.s32.totalorder %s27, 7
      %p185 = por %p183, %p184
      %p186 = scmp.ne.s32.totalorder %s177, %s178
      %p187 = scmp.eq.s32.totalorder %s27, 0
      %p188 = por %p186, %p187
      %p189 = scmp.ne.s32.totalorder %s177, %s178
      %p190 = scmp.eq.s32.totalorder %s28, 7
      %p191 = por %p189, %p190
      %p193 = scmp.ne.s32.totalorder %s178, %s192
      %p194 = scmp.eq.s32.totalorder %s28, 0
      %p195 = por %p193, %p194
      %s197 = sadd.s32 %s196, 1
      %p200 = scmp.eq.s32.totalorder %s22, 7
      %p201 = scmp.ne.s32.totalorder %s196, %s198
      %p202 = scmp.eq.s32.totalorder %s22, 0
      %p203 = por %p201, %p202
      %p204 = scmp.ne.s32.totalorder %s196, %s198
      %p205 = scmp.eq.s32.totalorder %s27, 7
      %p206 = por %p204, %p205
      %p207 = scmp.ne.s32.totalorder %s198, %s199
      %p208 = scmp.eq.s32.totalorder %s27, 0
      %p209 = por %p207, %p208
      %p210 = scmp.ne.s32.totalorder %s198, %s199
      %p211 = scmp.eq.s32.totalorder %s28, 7
      %p212 = por %p210, %p211
      %p214 = scmp.ne.s32.totalorder %s199, %s213
      %p215 = scmp.eq.s32.totalorder %s28, 0
      %p216 = por %p214, %p215
      %s218 = sadd.s32 %s217, 1
      %p221 = scmp.eq.s32.totalorder %s22, 7
      %p222 = scmp.ne.s32.totalorder %s217, %s219
      %p223 = scmp.eq.s32.totalorder %s22, 0
      %p224 = por %p222, %p223
      %p225 = scmp.ne.s32.totalorder %s217, %s219
      %p226 = scmp.eq.s32.totalorder %s27, 7
      %p227 = por %p225, %p226
      %p228 = scmp.ne.s32.totalorder %s219, %s220
      %p229 = scmp.eq.s32.totalorder %s27, 0
      %p230 = por %p228, %p229
      %p231 = scmp.ne.s32.totalorder %s219, %s220
      %p232 = scmp.eq.s32.totalorder %s28, 7
      %p233 = por %p231, %p232
      %p235 = scmp.ne.s32.totalorder %s220, %s234
      %p236 = scmp.eq.s32.totalorder %s28, 0
      %p237 = por %p235, %p236
      %s239 = sadd.s32 %s238, 1
      %p242 = scmp.eq.s32.totalorder %s22, 7
      %p243 = scmp.ne.s32.totalorder %s238, %s240
      %p244 = scmp.eq.s32.totalorder %s22, 0
      %p245 = por %p243, %p244
      %p246 = scmp.ne.s32.totalorder %s238, %s240
      %p247 = scmp.eq.s32.totalorder %s27, 7
      %p248 = por %p246, %p247
      %p249 = scmp.ne.s32.totalorder %s240, %s241
      %p250 = scmp.eq.s32.totalorder %s27, 0
      %p251 = por %p249, %p250
      %p252 = scmp.ne.s32.totalorder %s240, %s241
      %p253 = scmp.eq.s32.totalorder %s28, 7
      %p254 = por %p252, %p253
      %p256 = scmp.ne.s32.totalorder %s241, %s255
      %p257 = scmp.eq.s32.totalorder %s28, 0
      %p258 = por %p256, %p257
      %s259 = ssub.s32 %s29, %s41
      %p260 = scmp.eq.s32.totalorder %s259, 0
      %s262 = sadd.s32 %s261, 1
      %s263 = scalar_select %p260, %s261, %s262
      %p266 = pneg %p260
      %p267 = scmp.eq.s32.totalorder %s22, 7
      %p268 = por %p266, %p267
      %p269 = scmp.ne.s32.totalorder %s261, %s264
      %p270 = scmp.eq.s32.totalorder %s22, 0
      %p271 = por %p269, %p270
      %p272 = scmp.ne.s32.totalorder %s261, %s264
      %p273 = scmp.eq.s32.totalorder %s27, 7
      %p274 = por %p272, %p273
      %p275 = scmp.ne.s32.totalorder %s264, %s265
      %p276 = scmp.eq.s32.totalorder %s27, 0
      %p277 = por %p275, %p276
      %p278 = scmp.ne.s32.totalorder %s264, %s265
      %p279 = scmp.eq.s32.totalorder %s28, 7
      %p280 = por %p278, %p279
      %p282 = scmp.ne.s32.totalorder %s265, %s281
      %p283 = scmp.eq.s32.totalorder %s28, 0
      %p284 = por %p282, %p283
      %p285 = scmp.le.s32.totalorder 1, %s22
      %p286 = scmp.lt.s32.totalorder %s22, 9
      %p287 = pnand %p285, %p286
      %p288 = pneg %p287
      // Predicated region
      $region9: #{tpu_custom_call.1} parent=5 // pred_check
        _
      $region10: #{tpu_custom_call.1} parent=5 // pred_check_branch
        %290 = sbr.rel (%p287) target = $region12
      $region11: #{tpu_custom_call.1} parent=5 // pred_region
        %s291 = ssub.s32 %s22, 1
        // Predicated region
        $region13: #{tpu_custom_call.1} parent=11 // pred_check
          %p292 = pneg %p83
        $region14: #{tpu_custom_call.1} parent=11 // pred_check_branch
          %294 = sbr.rel (%p292) target = $region16
        $region15: #{tpu_custom_call.1} parent=11 // pred_region
          %296 = vsyncadd [#allocation5], 0
          %s298 = sshll.u32 %s1, 4
          %s299 = int_to_ptr.hbm [resolvable:$true] %s298
          %s300 = sshll.u32 [#allocation4], 4
          %s301 = int_to_ptr.vmem [resolvable:$true] %s300
          %303 = dma.hbm_to_vmem [thread:$0]  %s299, 64, %s301, [#allocation5]
        $region16: #{tpu_custom_call.1} parent=11 // pred_fallthru
          _
        // Predicated region
        $region17: #{tpu_custom_call.1} parent=11 // pred_check
          %p304 = pneg %p104
        $region18: #{tpu_custom_call.1} parent=11 // pred_check_branch
          %306 = sbr.rel (%p304) target = $region20
        $region19: #{tpu_custom_call.1} parent=11 // pred_region
          %308 = vsyncadd [#allocation8], 0
          %s309 = sshll.u32 %s2, 4
          %s310 = int_to_ptr.hbm [resolvable:$true] %s309
          %s311 = sshll.u32 [#allocation7], 4
          %s312 = int_to_ptr.vmem [resolvable:$true] %s311
          %317 = dma.hbm_to_vmem [thread:$0]  %s310, 3072, %s312, [#allocation8], 64, 64, 4
        $region20: #{tpu_custom_call.1} parent=11 // pred_fallthru
          _
        // Predicated region
        $region21: #{tpu_custom_call.1} parent=11 // pred_check
          %p318 = pneg %p125
        $region22: #{tpu_custom_call.1} parent=11 // pred_check_branch
          %320 = sbr.rel (%p318) target = $region24
        $region23: #{tpu_custom_call.1} parent=11 // pred_region
          %322 = vsyncadd [#allocation8], 0
          %s323 = sshll.u32 %s3, 4
          %s324 = int_to_ptr.hbm [resolvable:$true] %s323
          %s325 = sshll.u32 [#allocation9], 4
          %s326 = int_to_ptr.vmem [resolvable:$true] %s325
          %331 = dma.hbm_to_vmem [thread:$0]  %s324, 64, %s326, [#allocation8], 16, 16, 1
        $region24: #{tpu_custom_call.1} parent=11 // pred_fallthru
          _
        // Predicated region
        $region25: #{tpu_custom_call.1} parent=11 // pred_check
          %p332 = pneg %p146
        $region26: #{tpu_custom_call.1} parent=11 // pred_check_branch
          %334 = sbr.rel (%p332) target = $region28
        $region27: #{tpu_custom_call.1} parent=11 // pred_region
          _
        $region28: #{tpu_custom_call.1} parent=11 // pred_fallthru
          _
        // Predicated region
        $region29: #{tpu_custom_call.1} parent=11 // pred_check
          %p335 = pneg %p167
        $region30: #{tpu_custom_call.1} parent=11 // pred_check_branch
          %337 = sbr.rel (%p335) target = $region32
        $region31: #{tpu_custom_call.1} parent=11 // pred_region
          %339 = vsyncadd [#allocation11], 0
          %s341 = sshll.u32 %s5, 4
          %s342 = int_to_ptr.hbm [resolvable:$true] %s341
          %s343 = sshll.u32 [#allocation10], 4
          %s344 = int_to_ptr.vmem [resolvable:$true] %s343
          %346 = dma.hbm_to_vmem [thread:$0]  %s342, 16, %s344, [#allocation11]
        $region32: #{tpu_custom_call.1} parent=11 // pred_fallthru
          _
        // Predicated region
        $region33: #{tpu_custom_call.1} parent=11 // pred_check
          %p347 = pneg %p188
        $region34: #{tpu_custom_call.1} parent=11 // pred_check_branch
          %349 = sbr.rel (%p347) target = $region36
        $region35: #{tpu_custom_call.1} parent=11 // pred_region
          _
        $region36: #{tpu_custom_call.1} parent=11 // pred_fallthru
          _
        // Predicated region
        $region37: #{tpu_custom_call.1} parent=11 // pred_check
          %p350 = pneg %p209
        $region38: #{tpu_custom_call.1} parent=11 // pred_check_branch
          %352 = sbr.rel (%p350) target = $region40
        $region39: #{tpu_custom_call.1} parent=11 // pred_region
          _
        $region40: #{tpu_custom_call.1} parent=11 // pred_fallthru
          _
        // Predicated region
        $region41: #{tpu_custom_call.1} parent=11 // pred_check
          %p353 = pneg %p230
        $region42: #{tpu_custom_call.1} parent=11 // pred_check_branch
          %355 = sbr.rel (%p353) target = $region44
        $region43: #{tpu_custom_call.1} parent=11 // pred_region
          _
        $region44: #{tpu_custom_call.1} parent=11 // pred_fallthru
          _
        // Predicated region
        $region45: #{tpu_custom_call.1} parent=11 // pred_check
          %p356 = pneg %p251
        $region46: #{tpu_custom_call.1} parent=11 // pred_check_branch
          %358 = sbr.rel (%p356) target = $region48
        $region47: #{tpu_custom_call.1} parent=11 // pred_region
          _
        $region48: #{tpu_custom_call.1} parent=11 // pred_fallthru
          _
      $region12: #{tpu_custom_call.1} parent=5 // pred_fallthru
        _
      %p359 = scmp.lt.s32.totalorder %s22, 8
      // Predicated region
      $region49: #{tpu_custom_call.1} parent=5 // pred_check
        %p360 = pneg %p359
      $region50: #{tpu_custom_call.1} parent=5 // pred_check_branch
        %362 = sbr.rel (%p360) target = $region52
      $region51: #{tpu_custom_call.1} parent=5 // pred_region
        // Predicated region
        $region53: #{tpu_custom_call.1} parent=51 // pred_check
          %p363 = pneg %p56
        $region54: #{tpu_custom_call.1} parent=51 // pred_check_branch
          %365 = sbr.rel (%p363) target = $region56
        $region55: #{tpu_custom_call.1} parent=51 // pred_region
          %s366 = sand.u32 %s46, 1
          %s367 = sand.u32 %s46, 1
          %s368 = smul.addr %s367, 64
          %s369 = scalar_lea.vmem [#allocation3], %s368
          %s370 = smul.u32 8, %s29
          %s371 = smul.u32 2, %s30
          %s372 = smul.addr %s370, 8
          %s373 = sadd.s32 %s371, %s372
          %s374 = smul.addr %s373, 4
          %s375 = scalar_lea.vmem %s0, %s374
          // Predicated region
          $region57: #{tpu_custom_call.1} parent=55 // pred_check
            _
          $region58: #{tpu_custom_call.1} parent=55 // pred_check_branch
            %377 = sbr.rel (0) target = $region60
          $region59: #{tpu_custom_call.1} parent=55 // pred_region
            // Predicated region
            $region61: #{tpu_custom_call.1} parent=59 // pred_check
              _
            $region62: #{tpu_custom_call.1} parent=59 // pred_check_branch
              %379 = sbr.rel target = $region64
            $region63: #{tpu_custom_call.1} parent=59 // pred_region
              // Predicated region
              $region76: #{tpu_custom_call.1} parent=63 // pred_check
                _
              $region77: #{tpu_custom_call.1} parent=63 // pred_check_branch
                %425 = sbr.rel (0) target = $region79
              $region78: #{tpu_custom_call.1} parent=63 // pred_region
                loop: start=0, step=1, limit=1
                $region80: #{tpu_custom_call.1} parent=78 // loop_pre_header
                  _
                $region81: #{tpu_custom_call.1} parent=78 // loop_header
                  %s427 = sphi 0, %s431
                  %p428 = scmp.ge.s32.totalorder %s427, 1
                  %s432 = sphi %s375, %s375
                  %s433 = sphi %s369, %s369
                $region82: #{tpu_custom_call.1} parent=78 // loop_header_branch
                  %430 = sbr.rel (%p428) target = $region86
                $region83: #{tpu_custom_call.1} parent=78 // loop_body
                  _
                $region84: #{tpu_custom_call.1} parent=78 // loop_footer
                  %s431 = sadd.s32 1, %s427
                $region85: #{tpu_custom_call.1} parent=78 // loop_footer_branch
                  %426 = sbr.rel target = $region81
                $region86: #{tpu_custom_call.1} parent=78 // loop_exit
                  _
                %s435 = ssub.s32 16, 1
                loop: start=0, step=1, limit=1
                $region87: #{tpu_custom_call.1} parent=78 // loop_pre_header
                  _
                $region88: #{tpu_custom_call.1} parent=78 // loop_header
                  %s437 = sphi 0, %s441
                  %p438 = scmp.ge.s32.totalorder %s437, 1
                  %s442 = sphi %s375, %s375
                  %s443 = sphi %s369, %s369
                $region89: #{tpu_custom_call.1} parent=78 // loop_header_branch
                  %440 = sbr.rel (%p438) target = $region93
                $region90: #{tpu_custom_call.1} parent=78 // loop_body
                  %v444 = vld [vmem:[%s442] sm:%s435]
                  %445 = vst [vmem:[%s443] sm:%s435] %v444
                  %v446 = vld [vmem:[%s442 + $0x4] sm:%s435]
                  %447 = vst [vmem:[%s443 + $0x4] sm:%s435] %v446
                  %v448 = vld [vmem:[%s442 + $0x20] sm:%s435]
                  %449 = vst [vmem:[%s443 + $0x8] sm:%s435] %v448
                  %v450 = vld [vmem:[%s442 + $0x24] sm:%s435]
                  %451 = vst [vmem:[%s443 + $0xc] sm:%s435] %v450
                  %v452 = vld [vmem:[%s442 + $0x40] sm:%s435]
                  %453 = vst [vmem:[%s443 + $0x10] sm:%s435] %v452
                  %v454 = vld [vmem:[%s442 + $0x44] sm:%s435]
                  %455 = vst [vmem:[%s443 + $0x14] sm:%s435] %v454
                  %v456 = vld [vmem:[%s442 + $0x60] sm:%s435]
                  %457 = vst [vmem:[%s443 + $0x18] sm:%s435] %v456
                  %v458 = vld [vmem:[%s442 + $0x64] sm:%s435]
                  %459 = vst [vmem:[%s443 + $0x1c] sm:%s435] %v458
                  %v460 = vld [vmem:[%s442 + $0x80] sm:%s435]
                  %461 = vst [vmem:[%s443 + $0x20] sm:%s435] %v460
                  %v462 = vld [vmem:[%s442 + $0x84] sm:%s435]
                  %463 = vst [vmem:[%s443 + $0x24] sm:%s435] %v462
                  %v464 = vld [vmem:[%s442 + $0xa0] sm:%s435]
                  %465 = vst [vmem:[%s443 + $0x28] sm:%s435] %v464
                  %v466 = vld [vmem:[%s442 + $0xa4] sm:%s435]
                  %467 = vst [vmem:[%s443 + $0x2c] sm:%s435] %v466
                  %v468 = vld [vmem:[%s442 + $0xc0] sm:%s435]
                  %469 = vst [vmem:[%s443 + $0x30] sm:%s435] %v468
                  %v470 = vld [vmem:[%s442 + $0xc4] sm:%s435]
                  %471 = vst [vmem:[%s443 + $0x34] sm:%s435] %v470
                  %v472 = vld [vmem:[%s442 + $0xe0] sm:%s435]
                  %473 = vst [vmem:[%s443 + $0x38] sm:%s435] %v472
                  %v474 = vld [vmem:[%s442 + $0xe4] sm:%s435]
                  %475 = vst [vmem:[%s443 + $0x3c] sm:%s435] %v474
                $region91: #{tpu_custom_call.1} parent=78 // loop_footer
                  %s441 = sadd.s32 1, %s437
                $region92: #{tpu_custom_call.1} parent=78 // loop_footer_branch
                  %436 = sbr.rel target = $region88
                $region93: #{tpu_custom_call.1} parent=78 // loop_exit
                  _
              $region79: #{tpu_custom_call.1} parent=63 // pred_fallthru
                _
            $region64: #{tpu_custom_call.1} parent=59 // pred_fallthru
              _
            // Predicated region
            $region65: #{tpu_custom_call.1} parent=59 // pred_check
              _
            $region66: #{tpu_custom_call.1} parent=59 // pred_check_branch
              %381 = sbr.rel (0) target = $region68
            $region67: #{tpu_custom_call.1} parent=59 // pred_region
              %s383 = ssub.s32 16, 1
              loop: start=0, step=1, limit=1
              $region69: #{tpu_custom_call.1} parent=67 // loop_pre_header
                _
              $region70: #{tpu_custom_call.1} parent=67 // loop_header
                %s385 = sphi 0, %s389
                %p386 = scmp.ge.s32.totalorder %s385, 1
                %s390 = sphi %s375, %s375
                %s391 = sphi %s369, %s369
              $region71: #{tpu_custom_call.1} parent=67 // loop_header_branch
                %388 = sbr.rel (%p386) target = $region75
              $region72: #{tpu_custom_call.1} parent=67 // loop_body
                %v392 = vld [vmem:[%s390] sm:%s383]
                %393 = vst [vmem:[%s391] sm:%s383] %v392
                %v394 = vld [vmem:[%s390 + $0x4] sm:%s383]
                %395 = vst [vmem:[%s391 + $0x4] sm:%s383] %v394
                %v396 = vld [vmem:[%s390 + $0x20] sm:%s383]
                %397 = vst [vmem:[%s391 + $0x8] sm:%s383] %v396
                %v398 = vld [vmem:[%s390 + $0x24] sm:%s383]
                %399 = vst [vmem:[%s391 + $0xc] sm:%s383] %v398
                %v400 = vld [vmem:[%s390 + $0x40] sm:%s383]
                %401 = vst [vmem:[%s391 + $0x10] sm:%s383] %v400
                %v402 = vld [vmem:[%s390 + $0x44] sm:%s383]
                %403 = vst [vmem:[%s391 + $0x14] sm:%s383] %v402
                %v404 = vld [vmem:[%s390 + $0x60] sm:%s383]
                %405 = vst [vmem:[%s391 + $0x18] sm:%s383] %v404
                %v406 = vld [vmem:[%s390 + $0x64] sm:%s383]
                %407 = vst [vmem:[%s391 + $0x1c] sm:%s383] %v406
                %v408 = vld [vmem:[%s390 + $0x80] sm:%s383]
                %409 = vst [vmem:[%s391 + $0x20] sm:%s383] %v408
                %v410 = vld [vmem:[%s390 + $0x84] sm:%s383]
                %411 = vst [vmem:[%s391 + $0x24] sm:%s383] %v410
                %v412 = vld [vmem:[%s390 + $0xa0] sm:%s383]
                %413 = vst [vmem:[%s391 + $0x28] sm:%s383] %v412
                %v414 = vld [vmem:[%s390 + $0xa4] sm:%s383]
                %415 = vst [vmem:[%s391 + $0x2c] sm:%s383] %v414
                %v416 = vld [vmem:[%s390 + $0xc0] sm:%s383]
                %417 = vst [vmem:[%s391 + $0x30] sm:%s383] %v416
                %v418 = vld [vmem:[%s390 + $0xc4] sm:%s383]
                %419 = vst [vmem:[%s391 + $0x34] sm:%s383] %v418
                %v420 = vld [vmem:[%s390 + $0xe0] sm:%s383]
                %421 = vst [vmem:[%s391 + $0x38] sm:%s383] %v420
                %v422 = vld [vmem:[%s390 + $0xe4] sm:%s383]
                %423 = vst [vmem:[%s391 + $0x3c] sm:%s383] %v422
              $region73: #{tpu_custom_call.1} parent=67 // loop_footer
                %s389 = sadd.s32 1, %s385
              $region74: #{tpu_custom_call.1} parent=67 // loop_footer_branch
                %384 = sbr.rel target = $region70
              $region75: #{tpu_custom_call.1} parent=67 // loop_exit
                _
            $region68: #{tpu_custom_call.1} parent=59 // pred_fallthru
              _
          $region60: #{tpu_custom_call.1} parent=55 // pred_fallthru
            _
          %476 = vnop
        $region56: #{tpu_custom_call.1} parent=51 // pred_fallthru
          _
      $region52: #{tpu_custom_call.1} parent=5 // pred_fallthru
        _
      %p477 = scmp.le.s32.totalorder 1, %s22
      %p478 = scmp.lt.s32.totalorder %s22, 9
      %p479 = pnand %p477, %p478
      %p480 = pneg %p479
      // Predicated region
      $region94: #{tpu_custom_call.1} parent=5 // pred_check
        _
      $region95: #{tpu_custom_call.1} parent=5 // pred_check_branch
        %482 = sbr.rel (%p479) target = $region97
      $region96: #{tpu_custom_call.1} parent=5 // pred_region
        %s483 = ssub.s32 %s22, 1
        %s484 = sand.u32 %s49, 1
        %s485 = sand.u32 %s49, 1
        %s486 = smul.addr %s485, 64
        %s487 = scalar_lea.vmem [#allocation3], %s486
        // Predicated region
        $region98: #{tpu_custom_call.1} parent=96 // pred_check
          %p488 = pneg %p62
        $region99: #{tpu_custom_call.1} parent=96 // pred_check_branch
          %490 = sbr.rel (%p488) target = $region101
        $region100: #{tpu_custom_call.1} parent=96 // pred_region
          _
        $region101: #{tpu_custom_call.1} parent=96 // pred_fallthru
          _
        // Predicated region
        $region102: #{tpu_custom_call.1} parent=96 // pred_check
          %p491 = pneg %p83
        $region103: #{tpu_custom_call.1} parent=96 // pred_check_branch
          %493 = sbr.rel (%p491) target = $region105
        $region104: #{tpu_custom_call.1} parent=96 // pred_region
          %495 = dma.done [#allocation5], 64
        $region105: #{tpu_custom_call.1} parent=96 // pred_fallthru
          _
        // Predicated region
        $region106: #{tpu_custom_call.1} parent=96 // pred_check
          %p496 = pneg %p104
        $region107: #{tpu_custom_call.1} parent=96 // pred_check_branch
          %498 = sbr.rel (%p496) target = $region109
        $region108: #{tpu_custom_call.1} parent=96 // pred_region
          %500 = dma.done [#allocation8], 3072
        $region109: #{tpu_custom_call.1} parent=96 // pred_fallthru
          _
        // Predicated region
        $region110: #{tpu_custom_call.1} parent=96 // pred_check
          %p501 = pneg %p125
        $region111: #{tpu_custom_call.1} parent=96 // pred_check_branch
          %503 = sbr.rel (%p501) target = $region113
        $region112: #{tpu_custom_call.1} parent=96 // pred_region
          %505 = dma.done [#allocation8], 64
        $region113: #{tpu_custom_call.1} parent=96 // pred_fallthru
          _
        // Predicated region
        $region114: #{tpu_custom_call.1} parent=96 // pred_check
          %p506 = pneg %p167
        $region115: #{tpu_custom_call.1} parent=96 // pred_check_branch
          %508 = sbr.rel (%p506) target = $region117
        $region116: #{tpu_custom_call.1} parent=96 // pred_region
          %510 = dma.done [#allocation11], 16
        $region117: #{tpu_custom_call.1} parent=96 // pred_fallthru
          _
        %s511 = sand.u32 %s49, 1
        %s512 = sand.u32 %s49, 1
        %s513 = smul.addr %s512, 64
        %s514 = scalar_lea.vmem [#allocation3], %s513
        %p515 = pneg %p62
        %p516 = pneg %p59
        %p517 = pneg %p83
        %p518 = pneg %p80
        %p519 = pneg %p104
        %p520 = pneg %p101
        %p521 = pneg %p125
        %p522 = pneg %p122
        %p523 = pneg %p146
        %p524 = pneg %p143
        %p525 = pneg %p167
        %p526 = pneg %p164
        %p527 = pneg %p188
        %p528 = pneg %p185
        %p529 = pneg %p209
        %p530 = pneg %p206
        %p531 = pneg %p230
        %p532 = pneg %p227
        %p533 = pneg %p251
        %p534 = pneg %p248
        %p535 = pneg %p277
        %p536 = pneg %p274
        %s537 = sand.u32 %s264, 1
        %s538 = scalar_lea.sflag [#allocation6], %s537
        %s539 = sand.u32 %s264, 1
        %s540 = smul.addr %s539, 8
        %s541 = scalar_lea.vmem [#allocation12], %s540
        %s542 = smul.u32 8, %s31
        %s543 = smul.u32 2, %s32
        %v545 = vld [vmem:[%s487] sm:$0xf]
        %v546 = vld [vmem:[%s487 + $0x4] sm:$0xf]
        %v547 = vld [vmem:[%s487 + $0x8] sm:$0xf]
        %v548 = vld [vmem:[%s487 + $0xc] sm:$0xf]
        %v549 = vld [vmem:[%s487 + $0x10] sm:$0xf]
        %v550 = vld [vmem:[%s487 + $0x14] sm:$0xf]
        %v551 = vld [vmem:[%s487 + $0x18] sm:$0xf]
        %v552 = vld [vmem:[%s487 + $0x1c] sm:$0xf]
        %v553 = vld [vmem:[%s487 + $0x20] sm:$0xf]
        %v554 = vld [vmem:[%s487 + $0x24] sm:$0xf]
        %v555 = vld [vmem:[%s487 + $0x28] sm:$0xf]
        %v556 = vld [vmem:[%s487 + $0x2c] sm:$0xf]
        %v557 = vld [vmem:[%s487 + $0x30] sm:$0xf]
        %v558 = vld [vmem:[%s487 + $0x34] sm:$0xf]
        %v559 = vld [vmem:[%s487 + $0x38] sm:$0xf]
        %v560 = vld [vmem:[%s487 + $0x3c] sm:$0xf]
        %v561 = vld [vmem:[#allocation4] sm:$0xf]
        %v562 = vld [vmem:[#allocation9] sm:$0x1]
        %v564 = vperm.slane %v562, 0
        %v582 = vunpack.c.l.b16 %v545
        %v583 = vunpack.c.l.b16 %v546
        %v584 = vunpack.c.l.b16 %v547
        %v585 = vunpack.c.l.b16 %v548
        %v586 = vunpack.c.l.b16 %v549
        %v587 = vunpack.c.l.b16 %v550
        %v588 = vunpack.c.l.b16 %v551
        %v589 = vunpack.c.l.b16 %v552
        %v590 = vunpack.c.l.b16 %v553
        %v591 = vunpack.c.l.b16 %v554
        %v592 = vunpack.c.l.b16 %v555
        %v593 = vunpack.c.l.b16 %v556
        %v594 = vunpack.c.l.b16 %v557
        %v595 = vunpack.c.l.b16 %v558
        %v596 = vunpack.c.l.b16 %v559
        %v597 = vunpack.c.l.b16 %v560
        %v598 = vpack.c.b16 %v583, %v582
        %v599 = vpack.c.b16 %v585, %v584
        %v600 = vpack.c.b16 %v587, %v586
        %v601 = vpack.c.b16 %v589, %v588
        %v602 = vpack.c.b16 %v591, %v590
        %v603 = vpack.c.b16 %v593, %v592
        %v604 = vpack.c.b16 %v595, %v594
        %v605 = vpack.c.b16 %v597, %v596
        %vm606 = vcmask 64512
        %v608 = vsel %vm606, %v598, 0
        %v611 = vsel %vm606, %v599, 0
        %v614 = vsel %vm606, %v600, 0
        %v617 = vsel %vm606, %v601, 0
        %v620 = vsel %vm606, %v602, 0
        %v623 = vsel %vm606, %v603, 0
        %v626 = vsel %vm606, %v604, 0
        %v629 = vsel %vm606, %v605, 0
        %vm631 = vcmask 1043456
        %v633 = vsel %vm631, %v561, 0
        %635 = vmatpush.bf16.msra.mxu0 0
        %636 = vmatpush.bf16.msra.mxu0 0
        %637 = vmatpush.bf16.msra.mxu0 0
        %638 = vmatpush.bf16.msra.mxu0 0
        %639 = vmatpush.bf16.msra.mxu0 0
        %640 = vmatpush.bf16.msra.mxu0 0
        %641 = vmatpush.bf16.msra.mxu0 0
        %642 = vmatpush.bf16.msra.mxu0 %v633
        %643 = vmatmul.bf16.gmra.mxu0 %v608
        %v644 = vpop.f32.mrf.mxu0
        %v645 = vadd.f32 %v564, %v644
        %v646 = vpop.f32.mrf.mxu0
        %v647 = vadd.f32 %v564, %v646
        %648 = vmatmul.bf16.gmra.mxu0 %v611
        %v649 = vpop.f32.mrf.mxu0
        %v650 = vadd.f32 %v564, %v649
        %v651 = vpop.f32.mrf.mxu0
        %v652 = vadd.f32 %v564, %v651
        %653 = vmatmul.bf16.gmra.mxu0 %v614
        %v654 = vpop.f32.mrf.mxu0
        %v655 = vadd.f32 %v564, %v654
        %v656 = vpop.f32.mrf.mxu0
        %v657 = vadd.f32 %v564, %v656
        %658 = vmatmul.bf16.gmra.mxu0 %v617
        %v659 = vpop.f32.mrf.mxu0
        %v660 = vadd.f32 %v564, %v659
        %v661 = vpop.f32.mrf.mxu0
        %v662 = vadd.f32 %v564, %v661
        %663 = vmatmul.bf16.gmra.mxu0 %v620
        %v664 = vpop.f32.mrf.mxu0
        %v665 = vadd.f32 %v564, %v664
        %v666 = vpop.f32.mrf.mxu0
        %v667 = vadd.f32 %v564, %v666
        %668 = vmatmul.bf16.gmra.mxu0 %v623
        %v669 = vpop.f32.mrf.mxu0
        %v670 = vadd.f32 %v564, %v669
        %v671 = vpop.f32.mrf.mxu0
        %v672 = vadd.f32 %v564, %v671
        %673 = vmatmul.bf16.gmra.mxu0 %v626
        %v674 = vpop.f32.mrf.mxu0
        %v675 = vadd.f32 %v564, %v674
        %v676 = vpop.f32.mrf.mxu0
        %v677 = vadd.f32 %v564, %v676
        %678 = vmatmul.bf16.gmra.mxu0 %v629
        %v679 = vpop.f32.mrf.mxu0
        %v680 = vadd.f32 %v564, %v679
        %v681 = vpop.f32.mrf.mxu0
        %v682 = vadd.f32 %v564, %v681
        %683 = vdwg.mxu0
        %v684 = vmax.f32 %v645, 0.0
        %v685 = vmax.f32 %v647, 0.0
        %v686 = vmax.f32 %v650, 0.0
        %v687 = vmax.f32 %v652, 0.0
        %v688 = vmax.f32 %v655, 0.0
        %v689 = vmax.f32 %v657, 0.0
        %v690 = vmax.f32 %v660, 0.0
        %v691 = vmax.f32 %v662, 0.0
        %v692 = vmax.f32 %v665, 0.0
        %v693 = vmax.f32 %v667, 0.0
        %v694 = vmax.f32 %v670, 0.0
        %v695 = vmax.f32 %v672, 0.0
        %v696 = vmax.f32 %v675, 0.0
        %v697 = vmax.f32 %v677, 0.0
        %v698 = vmax.f32 %v680, 0.0
        %v699 = vmax.f32 %v682, 0.0
        %v700 = vld [vmem:[#allocation7] sm:$0xf]
        %v701 = vld [vmem:[#allocation7 + $0x4] sm:$0xf]
        %v702 = vld [vmem:[#allocation7 + $0x8] sm:$0xf]
        %v703 = vld [vmem:[#allocation7 + $0xc] sm:$0xf]
        %v704 = vld [vmem:[#allocation7 + $0x10] sm:$0xf]
        %v705 = vld [vmem:[#allocation7 + $0x14] sm:$0xf]
        %v706 = vld [vmem:[#allocation7 + $0x18] sm:$0xf]
        %v707 = vld [vmem:[#allocation7 + $0x1c] sm:$0xf]
        %v708 = vld [vmem:[#allocation7 + $0x20] sm:$0xf]
        %v709 = vld [vmem:[#allocation7 + $0x24] sm:$0xf]
        %v710 = vld [vmem:[#allocation7 + $0x28] sm:$0xf]
        %v711 = vld [vmem:[#allocation7 + $0x2c] sm:$0xf]
        %v712 = vld [vmem:[#allocation7 + $0x30] sm:$0xf]
        %v713 = vld [vmem:[#allocation7 + $0x34] sm:$0xf]
        %v714 = vld [vmem:[#allocation7 + $0x38] sm:$0xf]
        %v715 = vld [vmem:[#allocation7 + $0x3c] sm:$0xf]
        %s716 = scalar_lea.vmem [#allocation9], 1
        %v717 = vld [vmem:[%s716] sm:$0x1]
        %v718 = vpack.c.bf16 %v685, %v684
        %v719 = vpack.c.bf16 %v687, %v686
        %v720 = vpack.c.bf16 %v689, %v688
        %v721 = vpack.c.bf16 %v691, %v690
        %v722 = vpack.c.bf16 %v693, %v692
        %v723 = vpack.c.bf16 %v695, %v694
        %v724 = vpack.c.bf16 %v697, %v696
        %v725 = vpack.c.bf16 %v699, %v698
        %v727 = vperm.slane %v717, 0
        %v745 = vunpack.c.l.b16 %v700
        %v746 = vunpack.c.l.b16 %v701
        %v747 = vunpack.c.l.b16 %v702
        %v748 = vunpack.c.l.b16 %v703
        %v749 = vunpack.c.l.b16 %v704
        %v750 = vunpack.c.l.b16 %v705
        %v751 = vunpack.c.l.b16 %v706
        %v752 = vunpack.c.l.b16 %v707
        %v753 = vunpack.c.l.b16 %v708
        %v754 = vunpack.c.l.b16 %v709
        %v755 = vunpack.c.l.b16 %v710
        %v756 = vunpack.c.l.b16 %v711
        %v757 = vunpack.c.l.b16 %v712
        %v758 = vunpack.c.l.b16 %v713
        %v759 = vunpack.c.l.b16 %v714
        %v760 = vunpack.c.l.b16 %v715
        %v761 = vpack.c.b16 %v746, %v745
        %v762 = vpack.c.b16 %v748, %v747
        %v763 = vpack.c.b16 %v750, %v749
        %v764 = vpack.c.b16 %v752, %v751
        %v765 = vpack.c.b16 %v754, %v753
        %v766 = vpack.c.b16 %v756, %v755
        %v767 = vpack.c.b16 %v758, %v757
        %v768 = vpack.c.b16 %v760, %v759
        %777 = vmatpush.bf16.msra.mxu0 %v768
        %778 = vmatpush.bf16.msra.mxu0 %v767
        %779 = vmatpush.bf16.msra.mxu0 %v766
        %780 = vmatpush.bf16.msra.mxu0 %v765
        %781 = vmatpush.bf16.msra.mxu0 %v764
        %782 = vmatpush.bf16.msra.mxu0 %v763
        %783 = vmatpush.bf16.msra.mxu0 %v762
        %784 = vmatpush.bf16.msra.mxu0 %v761
        %785 = vmatmul.bf16.gmra.mxu0 %v718
        %v786 = vpop.f32.mrf.mxu0
        %v787 = vadd.f32 %v727, %v786
        %v788 = vpop.f32.mrf.mxu0
        %v789 = vadd.f32 %v727, %v788
        %790 = vmatmul.bf16.gmra.mxu0 %v719
        %v791 = vpop.f32.mrf.mxu0
        %v792 = vadd.f32 %v727, %v791
        %v793 = vpop.f32.mrf.mxu0
        %v794 = vadd.f32 %v727, %v793
        %795 = vmatmul.bf16.gmra.mxu0 %v720
        %v796 = vpop.f32.mrf.mxu0
        %v797 = vadd.f32 %v727, %v796
        %v798 = vpop.f32.mrf.mxu0
        %v799 = vadd.f32 %v727, %v798
        %800 = vmatmul.bf16.gmra.mxu0 %v721
        %v801 = vpop.f32.mrf.mxu0
        %v802 = vadd.f32 %v727, %v801
        %v803 = vpop.f32.mrf.mxu0
        %v804 = vadd.f32 %v727, %v803
        %805 = vmatmul.bf16.gmra.mxu0 %v722
        %v806 = vpop.f32.mrf.mxu0
        %v807 = vadd.f32 %v727, %v806
        %v808 = vpop.f32.mrf.mxu0
        %v809 = vadd.f32 %v727, %v808
        %810 = vmatmul.bf16.gmra.mxu0 %v723
        %v811 = vpop.f32.mrf.mxu0
        %v812 = vadd.f32 %v727, %v811
        %v813 = vpop.f32.mrf.mxu0
        %v814 = vadd.f32 %v727, %v813
        %815 = vmatmul.bf16.gmra.mxu0 %v724
        %v816 = vpop.f32.mrf.mxu0
        %v817 = vadd.f32 %v727, %v816
        %v818 = vpop.f32.mrf.mxu0
        %v819 = vadd.f32 %v727, %v818
        %820 = vmatmul.bf16.gmra.mxu0 %v725
        %v821 = vpop.f32.mrf.mxu0
        %v822 = vadd.f32 %v727, %v821
        %v823 = vpop.f32.mrf.mxu0
        %v824 = vadd.f32 %v727, %v823
        %825 = vdwg.mxu0
        %v826 = vmax.f32 %v787, 0.0
        %v827 = vmax.f32 %v789, 0.0
        %v828 = vmax.f32 %v792, 0.0
        %v829 = vmax.f32 %v794, 0.0
        %v830 = vmax.f32 %v797, 0.0
        %v831 = vmax.f32 %v799, 0.0
        %v832 = vmax.f32 %v802, 0.0
        %v833 = vmax.f32 %v804, 0.0
        %v834 = vmax.f32 %v807, 0.0
        %v835 = vmax.f32 %v809, 0.0
        %v836 = vmax.f32 %v812, 0.0
        %v837 = vmax.f32 %v814, 0.0
        %v838 = vmax.f32 %v817, 0.0
        %v839 = vmax.f32 %v819, 0.0
        %v840 = vmax.f32 %v822, 0.0
        %v841 = vmax.f32 %v824, 0.0
        %s842 = scalar_lea.vmem [#allocation7], 64
        %v843 = vld [vmem:[%s842] sm:$0xf]
        %v844 = vld [vmem:[%s842 + $0x4] sm:$0xf]
        %v845 = vld [vmem:[%s842 + $0x8] sm:$0xf]
        %v846 = vld [vmem:[%s842 + $0xc] sm:$0xf]
        %v847 = vld [vmem:[%s842 + $0x10] sm:$0xf]
        %v848 = vld [vmem:[%s842 + $0x14] sm:$0xf]
        %v849 = vld [vmem:[%s842 + $0x18] sm:$0xf]
        %v850 = vld [vmem:[%s842 + $0x1c] sm:$0xf]
        %v851 = vld [vmem:[%s842 + $0x20] sm:$0xf]
        %v852 = vld [vmem:[%s842 + $0x24] sm:$0xf]
        %v853 = vld [vmem:[%s842 + $0x28] sm:$0xf]
        %v854 = vld [vmem:[%s842 + $0x2c] sm:$0xf]
        %v855 = vld [vmem:[%s842 + $0x30] sm:$0xf]
        %v856 = vld [vmem:[%s842 + $0x34] sm:$0xf]
        %v857 = vld [vmem:[%s842 + $0x38] sm:$0xf]
        %v858 = vld [vmem:[%s842 + $0x3c] sm:$0xf]
        %s859 = scalar_lea.vmem [#allocation9], 2
        %v860 = vld [vmem:[%s859] sm:$0x1]
        %v861 = vpack.c.bf16 %v827, %v826
        %v862 = vpack.c.bf16 %v829, %v828
        %v863 = vpack.c.bf16 %v831, %v830
        %v864 = vpack.c.bf16 %v833, %v832
        %v865 = vpack.c.bf16 %v835, %v834
        %v866 = vpack.c.bf16 %v837, %v836
        %v867 = vpack.c.bf16 %v839, %v838
        %v868 = vpack.c.bf16 %v841, %v840
        %v870 = vperm.slane %v860, 0
        %v888 = vunpack.c.l.b16 %v843
        %v889 = vunpack.c.l.b16 %v844
        %v890 = vunpack.c.l.b16 %v845
        %v891 = vunpack.c.l.b16 %v846
        %v892 = vunpack.c.l.b16 %v847
        %v893 = vunpack.c.l.b16 %v848
        %v894 = vunpack.c.l.b16 %v849
        %v895 = vunpack.c.l.b16 %v850
        %v896 = vunpack.c.l.b16 %v851
        %v897 = vunpack.c.l.b16 %v852
        %v898 = vunpack.c.l.b16 %v853
        %v899 = vunpack.c.l.b16 %v854
        %v900 = vunpack.c.l.b16 %v855
        %v901 = vunpack.c.l.b16 %v856
        %v902 = vunpack.c.l.b16 %v857
        %v903 = vunpack.c.l.b16 %v858
        %v904 = vpack.c.b16 %v889, %v888
        %v905 = vpack.c.b16 %v891, %v890
        %v906 = vpack.c.b16 %v893, %v892
        %v907 = vpack.c.b16 %v895, %v894
        %v908 = vpack.c.b16 %v897, %v896
        %v909 = vpack.c.b16 %v899, %v898
        %v910 = vpack.c.b16 %v901, %v900
        %v911 = vpack.c.b16 %v903, %v902
        %920 = vmatpush.bf16.msra.mxu0 %v911
        %921 = vmatpush.bf16.msra.mxu0 %v910
        %922 = vmatpush.bf16.msra.mxu0 %v909
        %923 = vmatpush.bf16.msra.mxu0 %v908
        %924 = vmatpush.bf16.msra.mxu0 %v907
        %925 = vmatpush.bf16.msra.mxu0 %v906
        %926 = vmatpush.bf16.msra.mxu0 %v905
        %927 = vmatpush.bf16.msra.mxu0 %v904
        %928 = vmatmul.bf16.gmra.mxu0 %v861
        %v929 = vpop.f32.mrf.mxu0
        %v930 = vadd.f32 %v870, %v929
        %v931 = vpop.f32.mrf.mxu0
        %v932 = vadd.f32 %v870, %v931
        %933 = vmatmul.bf16.gmra.mxu0 %v862
        %v934 = vpop.f32.mrf.mxu0
        %v935 = vadd.f32 %v870, %v934
        %v936 = vpop.f32.mrf.mxu0
        %v937 = vadd.f32 %v870, %v936
        %938 = vmatmul.bf16.gmra.mxu0 %v863
        %v939 = vpop.f32.mrf.mxu0
        %v940 = vadd.f32 %v870, %v939
        %v941 = vpop.f32.mrf.mxu0
        %v942 = vadd.f32 %v870, %v941
        %943 = vmatmul.bf16.gmra.mxu0 %v864
        %v944 = vpop.f32.mrf.mxu0
        %v945 = vadd.f32 %v870, %v944
        %v946 = vpop.f32.mrf.mxu0
        %v947 = vadd.f32 %v870, %v946
        %948 = vmatmul.bf16.gmra.mxu0 %v865
        %v949 = vpop.f32.mrf.mxu0
        %v950 = vadd.f32 %v870, %v949
        %v951 = vpop.f32.mrf.mxu0
        %v952 = vadd.f32 %v870, %v951
        %953 = vmatmul.bf16.gmra.mxu0 %v866
        %v954 = vpop.f32.mrf.mxu0
        %v955 = vadd.f32 %v870, %v954
        %v956 = vpop.f32.mrf.mxu0
        %v957 = vadd.f32 %v870, %v956
        %958 = vmatmul.bf16.gmra.mxu0 %v867
        %v959 = vpop.f32.mrf.mxu0
        %v960 = vadd.f32 %v870, %v959
        %v961 = vpop.f32.mrf.mxu0
        %v962 = vadd.f32 %v870, %v961
        %963 = vmatmul.bf16.gmra.mxu0 %v868
        %v964 = vpop.f32.mrf.mxu0
        %v965 = vadd.f32 %v870, %v964
        %v966 = vpop.f32.mrf.mxu0
        %v967 = vadd.f32 %v870, %v966
        %968 = vdwg.mxu0
        %v969 = vmax.f32 %v930, 0.0
        %v970 = vmax.f32 %v932, 0.0
        %v971 = vmax.f32 %v935, 0.0
        %v972 = vmax.f32 %v937, 0.0
        %v973 = vmax.f32 %v940, 0.0
        %v974 = vmax.f32 %v942, 0.0
        %v975 = vmax.f32 %v945, 0.0
        %v976 = vmax.f32 %v947, 0.0
        %v977 = vmax.f32 %v950, 0.0
        %v978 = vmax.f32 %v952, 0.0
        %v979 = vmax.f32 %v955, 0.0
        %v980 = vmax.f32 %v957, 0.0
        %v981 = vmax.f32 %v960, 0.0
        %v982 = vmax.f32 %v962, 0.0
        %v983 = vmax.f32 %v965, 0.0
        %v984 = vmax.f32 %v967, 0.0
        %s985 = scalar_lea.vmem [#allocation7], 128
        %v986 = vld [vmem:[%s985] sm:$0xf]
        %v987 = vld [vmem:[%s985 + $0x4] sm:$0xf]
        %v988 = vld [vmem:[%s985 + $0x8] sm:$0xf]
        %v989 = vld [vmem:[%s985 + $0xc] sm:$0xf]
        %v990 = vld [vmem:[%s985 + $0x10] sm:$0xf]
        %v991 = vld [vmem:[%s985 + $0x14] sm:$0xf]
        %v992 = vld [vmem:[%s985 + $0x18] sm:$0xf]
        %v993 = vld [vmem:[%s985 + $0x1c] sm:$0xf]
        %v994 = vld [vmem:[%s985 + $0x20] sm:$0xf]
        %v995 = vld [vmem:[%s985 + $0x24] sm:$0xf]
        %v996 = vld [vmem:[%s985 + $0x28] sm:$0xf]
        %v997 = vld [vmem:[%s985 + $0x2c] sm:$0xf]
        %v998 = vld [vmem:[%s985 + $0x30] sm:$0xf]
        %v999 = vld [vmem:[%s985 + $0x34] sm:$0xf]
        %v1000 = vld [vmem:[%s985 + $0x38] sm:$0xf]
        %v1001 = vld [vmem:[%s985 + $0x3c] sm:$0xf]
        %s1002 = scalar_lea.vmem [#allocation9], 3
        %v1003 = vld [vmem:[%s1002] sm:$0x1]
        %v1004 = vpack.c.bf16 %v970, %v969
        %v1005 = vpack.c.bf16 %v972, %v971
        %v1006 = vpack.c.bf16 %v974, %v973
        %v1007 = vpack.c.bf16 %v976, %v975
        %v1008 = vpack.c.bf16 %v978, %v977
        %v1009 = vpack.c.bf16 %v980, %v979
        %v1010 = vpack.c.bf16 %v982, %v981
        %v1011 = vpack.c.bf16 %v984, %v983
        %v1013 = vperm.slane %v1003, 0
        %v1031 = vunpack.c.l.b16 %v986
        %v1032 = vunpack.c.l.b16 %v987
        %v1033 = vunpack.c.l.b16 %v988
        %v1034 = vunpack.c.l.b16 %v989
        %v1035 = vunpack.c.l.b16 %v990
        %v1036 = vunpack.c.l.b16 %v991
        %v1037 = vunpack.c.l.b16 %v992
        %v1038 = vunpack.c.l.b16 %v993
        %v1039 = vunpack.c.l.b16 %v994
        %v1040 = vunpack.c.l.b16 %v995
        %v1041 = vunpack.c.l.b16 %v996
        %v1042 = vunpack.c.l.b16 %v997
        %v1043 = vunpack.c.l.b16 %v998
        %v1044 = vunpack.c.l.b16 %v999
        %v1045 = vunpack.c.l.b16 %v1000
        %v1046 = vunpack.c.l.b16 %v1001
        %v1047 = vpack.c.b16 %v1032, %v1031
        %v1048 = vpack.c.b16 %v1034, %v1033
        %v1049 = vpack.c.b16 %v1036, %v1035
        %v1050 = vpack.c.b16 %v1038, %v1037
        %v1051 = vpack.c.b16 %v1040, %v1039
        %v1052 = vpack.c.b16 %v1042, %v1041
        %v1053 = vpack.c.b16 %v1044, %v1043
        %v1054 = vpack.c.b16 %v1046, %v1045
        %1063 = vmatpush.bf16.msra.mxu0 %v1054
        %1064 = vmatpush.bf16.msra.mxu0 %v1053
        %1065 = vmatpush.bf16.msra.mxu0 %v1052
        %1066 = vmatpush.bf16.msra.mxu0 %v1051
        %1067 = vmatpush.bf16.msra.mxu0 %v1050
        %1068 = vmatpush.bf16.msra.mxu0 %v1049
        %1069 = vmatpush.bf16.msra.mxu0 %v1048
        %1070 = vmatpush.bf16.msra.mxu0 %v1047
        %1071 = vmatmul.bf16.gmra.mxu0 %v1004
        %v1072 = vpop.f32.mrf.mxu0
        %v1073 = vadd.f32 %v1013, %v1072
        %v1074 = vpop.f32.mrf.mxu0
        %v1075 = vadd.f32 %v1013, %v1074
        %1076 = vmatmul.bf16.gmra.mxu0 %v1005
        %v1077 = vpop.f32.mrf.mxu0
        %v1078 = vadd.f32 %v1013, %v1077
        %v1079 = vpop.f32.mrf.mxu0
        %v1080 = vadd.f32 %v1013, %v1079
        %1081 = vmatmul.bf16.gmra.mxu0 %v1006
        %v1082 = vpop.f32.mrf.mxu0
        %v1083 = vadd.f32 %v1013, %v1082
        %v1084 = vpop.f32.mrf.mxu0
        %v1085 = vadd.f32 %v1013, %v1084
        %1086 = vmatmul.bf16.gmra.mxu0 %v1007
        %v1087 = vpop.f32.mrf.mxu0
        %v1088 = vadd.f32 %v1013, %v1087
        %v1089 = vpop.f32.mrf.mxu0
        %v1090 = vadd.f32 %v1013, %v1089
        %1091 = vmatmul.bf16.gmra.mxu0 %v1008
        %v1092 = vpop.f32.mrf.mxu0
        %v1093 = vadd.f32 %v1013, %v1092
        %v1094 = vpop.f32.mrf.mxu0
        %v1095 = vadd.f32 %v1013, %v1094
        %1096 = vmatmul.bf16.gmra.mxu0 %v1009
        %v1097 = vpop.f32.mrf.mxu0
        %v1098 = vadd.f32 %v1013, %v1097
        %v1099 = vpop.f32.mrf.mxu0
        %v1100 = vadd.f32 %v1013, %v1099
        %1101 = vmatmul.bf16.gmra.mxu0 %v1010
        %v1102 = vpop.f32.mrf.mxu0
        %v1103 = vadd.f32 %v1013, %v1102
        %v1104 = vpop.f32.mrf.mxu0
        %v1105 = vadd.f32 %v1013, %v1104
        %1106 = vmatmul.bf16.gmra.mxu0 %v1011
        %v1107 = vpop.f32.mrf.mxu0
        %v1108 = vadd.f32 %v1013, %v1107
        %v1109 = vpop.f32.mrf.mxu0
        %v1110 = vadd.f32 %v1013, %v1109
        %1111 = vdwg.mxu0
        %v1112 = vmax.f32 %v1073, 0.0
        %v1113 = vmax.f32 %v1075, 0.0
        %v1114 = vmax.f32 %v1078, 0.0
        %v1115 = vmax.f32 %v1080, 0.0
        %v1116 = vmax.f32 %v1083, 0.0
        %v1117 = vmax.f32 %v1085, 0.0
        %v1118 = vmax.f32 %v1088, 0.0
        %v1119 = vmax.f32 %v1090, 0.0
        %v1120 = vmax.f32 %v1093, 0.0
        %v1121 = vmax.f32 %v1095, 0.0
        %v1122 = vmax.f32 %v1098, 0.0
        %v1123 = vmax.f32 %v1100, 0.0
        %v1124 = vmax.f32 %v1103, 0.0
        %v1125 = vmax.f32 %v1105, 0.0
        %v1126 = vmax.f32 %v1108, 0.0
        %v1127 = vmax.f32 %v1110, 0.0
        %v1128 = vld [vmem:[%s4] sm:$0xf]
        %v1129 = vld [vmem:[%s4 + $0x4] sm:$0xf]
        %v1130 = vld [vmem:[%s4 + $0x8] sm:$0xf]
        %v1131 = vld [vmem:[%s4 + $0xc] sm:$0xf]
        %v1132 = vld [vmem:[%s4 + $0x10] sm:$0xf]
        %v1133 = vld [vmem:[%s4 + $0x14] sm:$0xf]
        %v1134 = vld [vmem:[%s4 + $0x18] sm:$0xf]
        %v1135 = vld [vmem:[%s4 + $0x1c] sm:$0xf]
        %v1136 = vld [vmem:[%s4 + $0x20] sm:$0xf]
        %v1137 = vld [vmem:[%s4 + $0x24] sm:$0xf]
        %v1138 = vld [vmem:[%s4 + $0x28] sm:$0xf]
        %v1139 = vld [vmem:[%s4 + $0x2c] sm:$0xf]
        %v1140 = vld [vmem:[%s4 + $0x30] sm:$0xf]
        %v1141 = vld [vmem:[%s4 + $0x34] sm:$0xf]
        %v1142 = vld [vmem:[%s4 + $0x38] sm:$0xf]
        %v1143 = vld [vmem:[%s4 + $0x3c] sm:$0xf]
        %v1144 = vld [vmem:[#allocation10] sm:$0x1]
        %v1145 = vpack.c.bf16 %v1113, %v1112
        %v1146 = vpack.c.bf16 %v1115, %v1114
        %v1147 = vpack.c.bf16 %v1117, %v1116
        %v1148 = vpack.c.bf16 %v1119, %v1118
        %v1149 = vpack.c.bf16 %v1121, %v1120
        %v1150 = vpack.c.bf16 %v1123, %v1122
        %v1151 = vpack.c.bf16 %v1125, %v1124
        %v1152 = vpack.c.bf16 %v1127, %v1126
        %v1154 = vperm.slane %v1144, 0
        %v1172 = vunpack.c.l.b16 %v1128
        %v1173 = vunpack.c.l.b16 %v1129
        %v1174 = vunpack.c.l.b16 %v1130
        %v1175 = vunpack.c.l.b16 %v1131
        %v1176 = vunpack.c.l.b16 %v1132
        %v1177 = vunpack.c.l.b16 %v1133
        %v1178 = vunpack.c.l.b16 %v1134
        %v1179 = vunpack.c.l.b16 %v1135
        %v1180 = vunpack.c.l.b16 %v1136
        %v1181 = vunpack.c.l.b16 %v1137
        %v1182 = vunpack.c.l.b16 %v1138
        %v1183 = vunpack.c.l.b16 %v1139
        %v1184 = vunpack.c.l.b16 %v1140
        %v1185 = vunpack.c.l.b16 %v1141
        %v1186 = vunpack.c.l.b16 %v1142
        %v1187 = vunpack.c.l.b16 %v1143
        %v1188 = vpack.c.b16 %v1173, %v1172
        %v1189 = vpack.c.b16 %v1175, %v1174
        %v1190 = vpack.c.b16 %v1177, %v1176
        %v1191 = vpack.c.b16 %v1179, %v1178
        %v1192 = vpack.c.b16 %v1181, %v1180
        %v1193 = vpack.c.b16 %v1183, %v1182
        %v1194 = vpack.c.b16 %v1185, %v1184
        %v1195 = vpack.c.b16 %v1187, %v1186
        %1204 = vmatpush.bf16.msra.mxu0 %v1195
        %1205 = vmatpush.bf16.msra.mxu0 %v1194
        %1206 = vmatpush.bf16.msra.mxu0 %v1193
        %1207 = vmatpush.bf16.msra.mxu0 %v1192
        %1208 = vmatpush.bf16.msra.mxu0 %v1191
        %1209 = vmatpush.bf16.msra.mxu0 %v1190
        %1210 = vmatpush.bf16.msra.mxu0 %v1189
        %1211 = vmatpush.bf16.msra.mxu0 %v1188
        %1212 = vmatmul.bf16.gmra.mxu0 %v1145
        %v1213 = vpop.f32.mrf.mxu0
        %v1214 = vadd.f32 %v1154, %v1213
        %v1215 = vpop.f32.mrf.mxu0
        %v1216 = vadd.f32 %v1154, %v1215
        %1217 = vmatmul.bf16.gmra.mxu0 %v1146
        %v1218 = vpop.f32.mrf.mxu0
        %v1219 = vadd.f32 %v1154, %v1218
        %v1220 = vpop.f32.mrf.mxu0
        %v1221 = vadd.f32 %v1154, %v1220
        %1222 = vmatmul.bf16.gmra.mxu0 %v1147
        %v1223 = vpop.f32.mrf.mxu0
        %v1224 = vadd.f32 %v1154, %v1223
        %v1225 = vpop.f32.mrf.mxu0
        %v1226 = vadd.f32 %v1154, %v1225
        %1227 = vmatmul.bf16.gmra.mxu0 %v1148
        %v1228 = vpop.f32.mrf.mxu0
        %v1229 = vadd.f32 %v1154, %v1228
        %v1230 = vpop.f32.mrf.mxu0
        %v1231 = vadd.f32 %v1154, %v1230
        %1232 = vmatmul.bf16.gmra.mxu0 %v1149
        %v1233 = vpop.f32.mrf.mxu0
        %v1234 = vadd.f32 %v1154, %v1233
        %v1235 = vpop.f32.mrf.mxu0
        %v1236 = vadd.f32 %v1154, %v1235
        %1237 = vmatmul.bf16.gmra.mxu0 %v1150
        %v1238 = vpop.f32.mrf.mxu0
        %v1239 = vadd.f32 %v1154, %v1238
        %v1240 = vpop.f32.mrf.mxu0
        %v1241 = vadd.f32 %v1154, %v1240
        %1242 = vmatmul.bf16.gmra.mxu0 %v1151
        %v1243 = vpop.f32.mrf.mxu0
        %v1244 = vadd.f32 %v1154, %v1243
        %v1245 = vpop.f32.mrf.mxu0
        %v1246 = vadd.f32 %v1154, %v1245
        %1247 = vmatmul.bf16.gmra.mxu0 %v1152
        %v1248 = vpop.f32.mrf.mxu0
        %v1249 = vadd.f32 %v1154, %v1248
        %v1250 = vpop.f32.mrf.mxu0
        %v1251 = vadd.f32 %v1154, %v1250
        %1252 = vdwg.mxu0
        %v1253 = vmax.f32 %v1214, 0.0
        %v1254 = vmax.f32 %v1216, 0.0
        %v1255 = vmax.f32 %v1219, 0.0
        %v1256 = vmax.f32 %v1221, 0.0
        %v1257 = vmax.f32 %v1224, 0.0
        %v1258 = vmax.f32 %v1226, 0.0
        %v1259 = vmax.f32 %v1229, 0.0
        %v1260 = vmax.f32 %v1231, 0.0
        %v1261 = vmax.f32 %v1234, 0.0
        %v1262 = vmax.f32 %v1236, 0.0
        %v1263 = vmax.f32 %v1239, 0.0
        %v1264 = vmax.f32 %v1241, 0.0
        %v1265 = vmax.f32 %v1244, 0.0
        %v1266 = vmax.f32 %v1246, 0.0
        %v1267 = vmax.f32 %v1249, 0.0
        %v1268 = vmax.f32 %v1251, 0.0
        %v1269 = vmax.f32 %v1253, %v1254
        %v1270 = vrot.slane %v1269, 4
        %v1271 = vmax.f32 %v1269, %v1270
        %v1272 = vrot.slane %v1271, 2
        %v1273 = vmax.f32 %v1271, %v1272
        %v1274 = vrot.slane %v1273, 1
        %v1275 = vmax.f32 %v1273, %v1274
        %v1276 = vmax.f32 %v1255, %v1256
        %v1277 = vrot.slane %v1276, 4
        %v1278 = vmax.f32 %v1276, %v1277
        %v1279 = vrot.slane %v1278, 2
        %v1280 = vmax.f32 %v1278, %v1279
        %v1281 = vrot.slane %v1280, 1
        %v1282 = vmax.f32 %v1280, %v1281
        %v1283 = vmax.f32 %v1257, %v1258
        %v1284 = vrot.slane %v1283, 4
        %v1285 = vmax.f32 %v1283, %v1284
        %v1286 = vrot.slane %v1285, 2
        %v1287 = vmax.f32 %v1285, %v1286
        %v1288 = vrot.slane %v1287, 1
        %v1289 = vmax.f32 %v1287, %v1288
        %v1290 = vmax.f32 %v1259, %v1260
        %v1291 = vrot.slane %v1290, 4
        %v1292 = vmax.f32 %v1290, %v1291
        %v1293 = vrot.slane %v1292, 2
        %v1294 = vmax.f32 %v1292, %v1293
        %v1295 = vrot.slane %v1294, 1
        %v1296 = vmax.f32 %v1294, %v1295
        %v1297 = vmax.f32 %v1261, %v1262
        %v1298 = vrot.slane %v1297, 4
        %v1299 = vmax.f32 %v1297, %v1298
        %v1300 = vrot.slane %v1299, 2
        %v1301 = vmax.f32 %v1299, %v1300
        %v1302 = vrot.slane %v1301, 1
        %v1303 = vmax.f32 %v1301, %v1302
        %v1304 = vmax.f32 %v1263, %v1264
        %v1305 = vrot.slane %v1304, 4
        %v1306 = vmax.f32 %v1304, %v1305
        %v1307 = vrot.slane %v1306, 2
        %v1308 = vmax.f32 %v1306, %v1307
        %v1309 = vrot.slane %v1308, 1
        %v1310 = vmax.f32 %v1308, %v1309
        %v1311 = vmax.f32 %v1265, %v1266
        %v1312 = vrot.slane %v1311, 4
        %v1313 = vmax.f32 %v1311, %v1312
        %v1314 = vrot.slane %v1313, 2
        %v1315 = vmax.f32 %v1313, %v1314
        %v1316 = vrot.slane %v1315, 1
        %v1317 = vmax.f32 %v1315, %v1316
        %v1318 = vmax.f32 %v1267, %v1268
        %v1319 = vrot.slane %v1318, 4
        %v1320 = vmax.f32 %v1318, %v1319
        %v1321 = vrot.slane %v1320, 2
        %v1322 = vmax.f32 %v1320, %v1321
        %v1323 = vrot.slane %v1322, 1
        %v1324 = vmax.f32 %v1322, %v1323
        %p1325 = scmp.eq.s32.totalorder %s32, 0
        // Predicated region
        $region118: #{tpu_custom_call.1} parent=96 // pred_check
          %p1326 = pneg %p1325
        $region119: #{tpu_custom_call.1} parent=96 // pred_check_branch
          %1328 = sbr.rel (%p1326) target = $region121
        $region120: #{tpu_custom_call.1} parent=96 // pred_region
          %1329 = vst [vmem:[#allocation2] sm:$0xff] 0.0
        $region121: #{tpu_custom_call.1} parent=96 // pred_fallthru
          _
        %v1330 = vld [vmem:[#allocation2] sm:$0xff]
        %vm1339 = vcmask 1041409
        %v1340 = vsel %vm1339, %v1282, %v1275
        %vm1341 = vcmask 1042434
        %v1342 = vsel %vm1341, %v1289, %v1340
        %vm1343 = vcmask 1043459
        %v1344 = vsel %vm1343, %v1296, %v1342
        %vm1345 = vcmask 1044484
        %v1346 = vsel %vm1345, %v1303, %v1344
        %vm1347 = vcmask 1045509
        %v1348 = vsel %vm1347, %v1310, %v1346
        %vm1349 = vcmask 1046534
        %v1350 = vsel %vm1349, %v1317, %v1348
        %vm1351 = vcmask 1047559
        %v1352 = vsel %vm1351, %v1324, %v1350
        %v1354 = vmax.f32 %v1330, %v1352
        %1355 = vst [vmem:[#allocation2] sm:$0xff] %v1354
        %p1356 = scmp.eq.s32.totalorder %s32, 3
        // Predicated region
        $region122: #{tpu_custom_call.1} parent=96 // pred_check
          %p1357 = pneg %p1356
        $region123: #{tpu_custom_call.1} parent=96 // pred_check_branch
          %1359 = sbr.rel (%p1357) target = $region125
        $region124: #{tpu_custom_call.1} parent=96 // pred_region
          %v1360 = vld [vmem:[#allocation2] sm:$0xff]
          %v1361 = vpack.c.bf16 %v1360, %v1360
          %v1362 = vld [vmem:[%s6] sm:$0xff]
          %v1363 = vld [vmem:[%s6 + $0x8] sm:$0xff]
          %v1364 = vld [vmem:[%s6 + $0x10] sm:$0xff]
          %v1365 = vld [vmem:[%s6 + $0x18] sm:$0xff]
          %v1366 = vld [vmem:[%s6 + $0x20] sm:$0xff]
          %v1367 = vld [vmem:[%s6 + $0x28] sm:$0xff]
          %v1368 = vld [vmem:[%s6 + $0x30] sm:$0xff]
          %v1369 = vld [vmem:[%s6 + $0x38] sm:$0xff]
          %v1370 = vld [vmem:[%s6 + $0x40] sm:$0xff]
          %v1371 = vld [vmem:[%s6 + $0x48] sm:$0xff]
          %v1372 = vld [vmem:[%s6 + $0x50] sm:$0xff]
          %v1373 = vld [vmem:[%s6 + $0x58] sm:$0xff]
          %v1374 = vld [vmem:[%s6 + $0x60] sm:$0xff]
          %v1375 = vld [vmem:[%s6 + $0x68] sm:$0xff]
          %v1376 = vld [vmem:[%s6 + $0x70] sm:$0xff]
          %v1377 = vld [vmem:[%s6 + $0x78] sm:$0xff]
          %v1378 = vld [vmem:[%s6 + $0x80] sm:$0xff]
          %v1379 = vld [vmem:[%s6 + $0x88] sm:$0xff]
          %v1380 = vld [vmem:[%s6 + $0x90] sm:$0xff]
          %v1381 = vld [vmem:[%s6 + $0x98] sm:$0xff]
          %v1382 = vld [vmem:[%s6 + $0xa0] sm:$0xff]
          %v1383 = vld [vmem:[%s6 + $0xa8] sm:$0xff]
          %v1384 = vld [vmem:[%s6 + $0xb0] sm:$0xff]
          %v1385 = vld [vmem:[%s6 + $0xb8] sm:$0xff]
          %v1386 = vld [vmem:[%s6 + $0xc0] sm:$0xff]
          %v1387 = vld [vmem:[%s6 + $0xc8] sm:$0xff]
          %v1388 = vld [vmem:[%s6 + $0xd0] sm:$0xff]
          %v1389 = vld [vmem:[%s6 + $0xd8] sm:$0xff]
          %v1390 = vld [vmem:[%s6 + $0xe0] sm:$0xff]
          %v1391 = vld [vmem:[%s6 + $0xe8] sm:$0xff]
          %v1392 = vld [vmem:[%s6 + $0xf0] sm:$0xff]
          %v1393 = vld [vmem:[%s6 + $0xf8] sm:$0xff]
          %v1394 = vld [vmem:[%s7] sm:$0xf]
          %v1396 = vperm.slane %v1394, 0
          %v1397 = vperm.slane %v1394, 1
          %v1398 = vperm.slane %v1394, 2
          %v1399 = vperm.slane %v1394, 3
          %v1436 = vunpack.c.l.b16 %v1362
          %v1437 = vunpack.c.h.b16 %v1362
          %v1438 = vunpack.c.l.b16 %v1363
          %v1439 = vunpack.c.h.b16 %v1363
          %v1440 = vunpack.c.l.b16 %v1364
          %v1441 = vunpack.c.h.b16 %v1364
          %v1442 = vunpack.c.l.b16 %v1365
          %v1443 = vunpack.c.h.b16 %v1365
          %v1444 = vunpack.c.l.b16 %v1366
          %v1445 = vunpack.c.h.b16 %v1366
          %v1446 = vunpack.c.l.b16 %v1367
          %v1447 = vunpack.c.h.b16 %v1367
          %v1448 = vunpack.c.l.b16 %v1368
          %v1449 = vunpack.c.h.b16 %v1368
          %v1450 = vunpack.c.l.b16 %v1369
          %v1451 = vunpack.c.h.b16 %v1369
          %v1452 = vunpack.c.l.b16 %v1370
          %v1453 = vunpack.c.h.b16 %v1370
          %v1454 = vunpack.c.l.b16 %v1371
          %v1455 = vunpack.c.h.b16 %v1371
          %v1456 = vunpack.c.l.b16 %v1372
          %v1457 = vunpack.c.h.b16 %v1372
          %v1458 = vunpack.c.l.b16 %v1373
          %v1459 = vunpack.c.h.b16 %v1373
          %v1460 = vunpack.c.l.b16 %v1374
          %v1461 = vunpack.c.h.b16 %v1374
          %v1462 = vunpack.c.l.b16 %v1375
          %v1463 = vunpack.c.h.b16 %v1375
          %v1464 = vunpack.c.l.b16 %v1376
          %v1465 = vunpack.c.h.b16 %v1376
          %v1466 = vunpack.c.l.b16 %v1377
          %v1467 = vunpack.c.h.b16 %v1377
          %v1468 = vunpack.c.l.b16 %v1378
          %v1469 = vunpack.c.h.b16 %v1378
          %v1470 = vunpack.c.l.b16 %v1379
          %v1471 = vunpack.c.h.b16 %v1379
          %v1472 = vunpack.c.l.b16 %v1380
          %v1473 = vunpack.c.h.b16 %v1380
          %v1474 = vunpack.c.l.b16 %v1381
          %v1475 = vunpack.c.h.b16 %v1381
          %v1476 = vunpack.c.l.b16 %v1382
          %v1477 = vunpack.c.h.b16 %v1382
          %v1478 = vunpack.c.l.b16 %v1383
          %v1479 = vunpack.c.h.b16 %v1383
          %v1480 = vunpack.c.l.b16 %v1384
          %v1481 = vunpack.c.h.b16 %v1384
          %v1482 = vunpack.c.l.b16 %v1385
          %v1483 = vunpack.c.h.b16 %v1385
          %v1484 = vunpack.c.l.b16 %v1386
          %v1485 = vunpack.c.h.b16 %v1386
          %v1486 = vunpack.c.l.b16 %v1387
          %v1487 = vunpack.c.h.b16 %v1387
          %v1488 = vunpack.c.l.b16 %v1388
          %v1489 = vunpack.c.h.b16 %v1388
          %v1490 = vunpack.c.l.b16 %v1389
          %v1491 = vunpack.c.h.b16 %v1389
          %v1492 = vunpack.c.l.b16 %v1390
          %v1493 = vunpack.c.h.b16 %v1390
          %v1494 = vunpack.c.l.b16 %v1391
          %v1495 = vunpack.c.h.b16 %v1391
          %v1496 = vunpack.c.l.b16 %v1392
          %v1497 = vunpack.c.h.b16 %v1392
          %v1498 = vunpack.c.l.b16 %v1393
          %v1499 = vunpack.c.h.b16 %v1393
          %v1500 = vpack.c.b16 %v1440, %v1436
          %v1501 = vpack.c.b16 %v1441, %v1437
          %v1502 = vpack.c.b16 %v1442, %v1438
          %v1503 = vpack.c.b16 %v1443, %v1439
          %v1504 = vpack.c.b16 %v1448, %v1444
          %v1505 = vpack.c.b16 %v1449, %v1445
          %v1506 = vpack.c.b16 %v1450, %v1446
          %v1507 = vpack.c.b16 %v1451, %v1447
          %v1508 = vpack.c.b16 %v1456, %v1452
          %v1509 = vpack.c.b16 %v1457, %v1453
          %v1510 = vpack.c.b16 %v1458, %v1454
          %v1511 = vpack.c.b16 %v1459, %v1455
          %v1512 = vpack.c.b16 %v1464, %v1460
          %v1513 = vpack.c.b16 %v1465, %v1461
          %v1514 = vpack.c.b16 %v1466, %v1462
          %v1515 = vpack.c.b16 %v1467, %v1463
          %v1516 = vpack.c.b16 %v1472, %v1468
          %v1517 = vpack.c.b16 %v1473, %v1469
          %v1518 = vpack.c.b16 %v1474, %v1470
          %v1519 = vpack.c.b16 %v1475, %v1471
          %v1520 = vpack.c.b16 %v1480, %v1476
          %v1521 = vpack.c.b16 %v1481, %v1477
          %v1522 = vpack.c.b16 %v1482, %v1478
          %v1523 = vpack.c.b16 %v1483, %v1479
          %v1524 = vpack.c.b16 %v1488, %v1484
          %v1525 = vpack.c.b16 %v1489, %v1485
          %v1526 = vpack.c.b16 %v1490, %v1486
          %v1527 = vpack.c.b16 %v1491, %v1487
          %v1528 = vpack.c.b16 %v1496, %v1492
          %v1529 = vpack.c.b16 %v1497, %v1493
          %v1530 = vpack.c.b16 %v1498, %v1494
          %v1531 = vpack.c.b16 %v1499, %v1495
          %1564 = vmatpush.bf16.msra.mxu0 %v1528
          %1565 = vmatpush.bf16.msra.mxu0 %v1524
          %1566 = vmatpush.bf16.msra.mxu0 %v1520
          %1567 = vmatpush.bf16.msra.mxu0 %v1516
          %1568 = vmatpush.bf16.msra.mxu0 %v1512
          %1569 = vmatpush.bf16.msra.mxu0 %v1508
          %1570 = vmatpush.bf16.msra.mxu0 %v1504
          %1571 = vmatpush.bf16.msra.mxu0 %v1500
          %1572 = vmatmul.bf16.gmra.mxu0 %v1361
          %v1573 = vpop.f32.mrf.mxu0
          %v1574 = vadd.f32 %v1396, %v1573
          %v1575 = vpop.f32.mrf.mxu0
          %1576 = vdwg.mxu0
          %1577 = vmatpush.bf16.msra.mxu0 %v1529
          %1578 = vmatpush.bf16.msra.mxu0 %v1525
          %1579 = vmatpush.bf16.msra.mxu0 %v1521
          %1580 = vmatpush.bf16.msra.mxu0 %v1517
          %1581 = vmatpush.bf16.msra.mxu0 %v1513
          %1582 = vmatpush.bf16.msra.mxu0 %v1509
          %1583 = vmatpush.bf16.msra.mxu0 %v1505
          %1584 = vmatpush.bf16.msra.mxu0 %v1501
          %1585 = vmatmul.bf16.gmra.mxu0 %v1361
          %v1586 = vpop.f32.mrf.mxu0
          %v1587 = vadd.f32 %v1397, %v1586
          %v1588 = vpop.f32.mrf.mxu0
          %1589 = vdwg.mxu0
          %1590 = vmatpush.bf16.msra.mxu0 %v1530
          %1591 = vmatpush.bf16.msra.mxu0 %v1526
          %1592 = vmatpush.bf16.msra.mxu0 %v1522
          %1593 = vmatpush.bf16.msra.mxu0 %v1518
          %1594 = vmatpush.bf16.msra.mxu0 %v1514
          %1595 = vmatpush.bf16.msra.mxu0 %v1510
          %1596 = vmatpush.bf16.msra.mxu0 %v1506
          %1597 = vmatpush.bf16.msra.mxu0 %v1502
          %1598 = vmatmul.bf16.gmra.mxu0 %v1361
          %v1599 = vpop.f32.mrf.mxu0
          %v1600 = vadd.f32 %v1398, %v1599
          %v1601 = vpop.f32.mrf.mxu0
          %1602 = vdwg.mxu0
          %1603 = vmatpush.bf16.msra.mxu0 %v1531
          %1604 = vmatpush.bf16.msra.mxu0 %v1527
          %1605 = vmatpush.bf16.msra.mxu0 %v1523
          %1606 = vmatpush.bf16.msra.mxu0 %v1519
          %1607 = vmatpush.bf16.msra.mxu0 %v1515
          %1608 = vmatpush.bf16.msra.mxu0 %v1511
          %1609 = vmatpush.bf16.msra.mxu0 %v1507
          %1610 = vmatpush.bf16.msra.mxu0 %v1503
          %1611 = vmatmul.bf16.gmra.mxu0 %v1361
          %v1612 = vpop.f32.mrf.mxu0
          %v1613 = vadd.f32 %v1399, %v1612
          %v1614 = vpop.f32.mrf.mxu0
          %1615 = vdwg.mxu0
          %v1616 = vmax.f32 %v1574, 0.0
          %v1617 = vmax.f32 %v1587, 0.0
          %v1618 = vmax.f32 %v1600, 0.0
          %v1619 = vmax.f32 %v1613, 0.0
          %v1620 = vpack.c.bf16 %v1616, %v1616
          %v1621 = vpack.c.bf16 %v1617, %v1617
          %v1622 = vpack.c.bf16 %v1618, %v1618
          %v1623 = vpack.c.bf16 %v1619, %v1619
          %v1624 = vld [vmem:[%s8] sm:$0xf]
          %v1625 = vld [vmem:[%s8 + $0x4] sm:$0xf]
          %v1626 = vld [vmem:[%s8 + $0x8] sm:$0xf]
          %v1627 = vld [vmem:[%s8 + $0xc] sm:$0xf]
          %v1628 = vld [vmem:[%s8 + $0x10] sm:$0xf]
          %v1629 = vld [vmem:[%s8 + $0x14] sm:$0xf]
          %v1630 = vld [vmem:[%s8 + $0x18] sm:$0xf]
          %v1631 = vld [vmem:[%s8 + $0x1c] sm:$0xf]
          %v1632 = vld [vmem:[%s8 + $0x20] sm:$0xf]
          %v1633 = vld [vmem:[%s8 + $0x24] sm:$0xf]
          %v1634 = vld [vmem:[%s8 + $0x28] sm:$0xf]
          %v1635 = vld [vmem:[%s8 + $0x2c] sm:$0xf]
          %v1636 = vld [vmem:[%s8 + $0x30] sm:$0xf]
          %v1637 = vld [vmem:[%s8 + $0x34] sm:$0xf]
          %v1638 = vld [vmem:[%s8 + $0x38] sm:$0xf]
          %v1639 = vld [vmem:[%s8 + $0x3c] sm:$0xf]
          %v1640 = vld [vmem:[%s8 + $0x40] sm:$0xf]
          %v1641 = vld [vmem:[%s8 + $0x44] sm:$0xf]
          %v1642 = vld [vmem:[%s8 + $0x48] sm:$0xf]
          %v1643 = vld [vmem:[%s8 + $0x4c] sm:$0xf]
          %v1644 = vld [vmem:[%s8 + $0x50] sm:$0xf]
          %v1645 = vld [vmem:[%s8 + $0x54] sm:$0xf]
          %v1646 = vld [vmem:[%s8 + $0x58] sm:$0xf]
          %v1647 = vld [vmem:[%s8 + $0x5c] sm:$0xf]
          %v1648 = vld [vmem:[%s8 + $0x60] sm:$0xf]
          %v1649 = vld [vmem:[%s8 + $0x64] sm:$0xf]
          %v1650 = vld [vmem:[%s8 + $0x68] sm:$0xf]
          %v1651 = vld [vmem:[%s8 + $0x6c] sm:$0xf]
          %v1652 = vld [vmem:[%s8 + $0x70] sm:$0xf]
          %v1653 = vld [vmem:[%s8 + $0x74] sm:$0xf]
          %v1654 = vld [vmem:[%s8 + $0x78] sm:$0xf]
          %v1655 = vld [vmem:[%s8 + $0x7c] sm:$0xf]
          %v1656 = vld [vmem:[%s8 + $0x80] sm:$0xf]
          %v1657 = vld [vmem:[%s8 + $0x84] sm:$0xf]
          %v1658 = vld [vmem:[%s8 + $0x88] sm:$0xf]
          %v1659 = vld [vmem:[%s8 + $0x8c] sm:$0xf]
          %v1660 = vld [vmem:[%s8 + $0x90] sm:$0xf]
          %v1661 = vld [vmem:[%s8 + $0x94] sm:$0xf]
          %v1662 = vld [vmem:[%s8 + $0x98] sm:$0xf]
          %v1663 = vld [vmem:[%s8 + $0x9c] sm:$0xf]
          %v1664 = vld [vmem:[%s8 + $0xa0] sm:$0xf]
          %v1665 = vld [vmem:[%s8 + $0xa4] sm:$0xf]
          %v1666 = vld [vmem:[%s8 + $0xa8] sm:$0xf]
          %v1667 = vld [vmem:[%s8 + $0xac] sm:$0xf]
          %v1668 = vld [vmem:[%s8 + $0xb0] sm:$0xf]
          %v1669 = vld [vmem:[%s8 + $0xb4] sm:$0xf]
          %v1670 = vld [vmem:[%s8 + $0xb8] sm:$0xf]
          %v1671 = vld [vmem:[%s8 + $0xbc] sm:$0xf]
          %v1672 = vld [vmem:[%s8 + $0xc0] sm:$0xf]
          %v1673 = vld [vmem:[%s8 + $0xc4] sm:$0xf]
          %v1674 = vld [vmem:[%s8 + $0xc8] sm:$0xf]
          %v1675 = vld [vmem:[%s8 + $0xcc] sm:$0xf]
          %v1676 = vld [vmem:[%s8 + $0xd0] sm:$0xf]
          %v1677 = vld [vmem:[%s8 + $0xd4] sm:$0xf]
          %v1678 = vld [vmem:[%s8 + $0xd8] sm:$0xf]
          %v1679 = vld [vmem:[%s8 + $0xdc] sm:$0xf]
          %v1680 = vld [vmem:[%s8 + $0xe0] sm:$0xf]
          %v1681 = vld [vmem:[%s8 + $0xe4] sm:$0xf]
          %v1682 = vld [vmem:[%s8 + $0xe8] sm:$0xf]
          %v1683 = vld [vmem:[%s8 + $0xec] sm:$0xf]
          %v1684 = vld [vmem:[%s8 + $0xf0] sm:$0xf]
          %v1685 = vld [vmem:[%s8 + $0xf4] sm:$0xf]
          %v1686 = vld [vmem:[%s8 + $0xf8] sm:$0xf]
          %v1687 = vld [vmem:[%s8 + $0xfc] sm:$0xf]
          %v1688 = vld [vmem:[%s9] sm:$0x1]
          %v1690 = vperm.slane %v1688, 0
          %v1756 = vunpack.c.l.b16 %v1624
          %v1757 = vunpack.c.l.b16 %v1625
          %v1758 = vunpack.c.l.b16 %v1626
          %v1759 = vunpack.c.l.b16 %v1627
          %v1760 = vunpack.c.l.b16 %v1628
          %v1761 = vunpack.c.l.b16 %v1629
          %v1762 = vunpack.c.l.b16 %v1630
          %v1763 = vunpack.c.l.b16 %v1631
          %v1764 = vunpack.c.l.b16 %v1632
          %v1765 = vunpack.c.l.b16 %v1633
          %v1766 = vunpack.c.l.b16 %v1634
          %v1767 = vunpack.c.l.b16 %v1635
          %v1768 = vunpack.c.l.b16 %v1636
          %v1769 = vunpack.c.l.b16 %v1637
          %v1770 = vunpack.c.l.b16 %v1638
          %v1771 = vunpack.c.l.b16 %v1639
          %v1772 = vunpack.c.l.b16 %v1640
          %v1773 = vunpack.c.l.b16 %v1641
          %v1774 = vunpack.c.l.b16 %v1642
          %v1775 = vunpack.c.l.b16 %v1643
          %v1776 = vunpack.c.l.b16 %v1644
          %v1777 = vunpack.c.l.b16 %v1645
          %v1778 = vunpack.c.l.b16 %v1646
          %v1779 = vunpack.c.l.b16 %v1647
          %v1780 = vunpack.c.l.b16 %v1648
          %v1781 = vunpack.c.l.b16 %v1649
          %v1782 = vunpack.c.l.b16 %v1650
          %v1783 = vunpack.c.l.b16 %v1651
          %v1784 = vunpack.c.l.b16 %v1652
          %v1785 = vunpack.c.l.b16 %v1653
          %v1786 = vunpack.c.l.b16 %v1654
          %v1787 = vunpack.c.l.b16 %v1655
          %v1788 = vunpack.c.l.b16 %v1656
          %v1789 = vunpack.c.l.b16 %v1657
          %v1790 = vunpack.c.l.b16 %v1658
          %v1791 = vunpack.c.l.b16 %v1659
          %v1792 = vunpack.c.l.b16 %v1660
          %v1793 = vunpack.c.l.b16 %v1661
          %v1794 = vunpack.c.l.b16 %v1662
          %v1795 = vunpack.c.l.b16 %v1663
          %v1796 = vunpack.c.l.b16 %v1664
          %v1797 = vunpack.c.l.b16 %v1665
          %v1798 = vunpack.c.l.b16 %v1666
          %v1799 = vunpack.c.l.b16 %v1667
          %v1800 = vunpack.c.l.b16 %v1668
          %v1801 = vunpack.c.l.b16 %v1669
          %v1802 = vunpack.c.l.b16 %v1670
          %v1803 = vunpack.c.l.b16 %v1671
          %v1804 = vunpack.c.l.b16 %v1672
          %v1805 = vunpack.c.l.b16 %v1673
          %v1806 = vunpack.c.l.b16 %v1674
          %v1807 = vunpack.c.l.b16 %v1675
          %v1808 = vunpack.c.l.b16 %v1676
          %v1809 = vunpack.c.l.b16 %v1677
          %v1810 = vunpack.c.l.b16 %v1678
          %v1811 = vunpack.c.l.b16 %v1679
          %v1812 = vunpack.c.l.b16 %v1680
          %v1813 = vunpack.c.l.b16 %v1681
          %v1814 = vunpack.c.l.b16 %v1682
          %v1815 = vunpack.c.l.b16 %v1683
          %v1816 = vunpack.c.l.b16 %v1684
          %v1817 = vunpack.c.l.b16 %v1685
          %v1818 = vunpack.c.l.b16 %v1686
          %v1819 = vunpack.c.l.b16 %v1687
          %v1820 = vpack.c.b16 %v1757, %v1756
          %v1821 = vpack.c.b16 %v1759, %v1758
          %v1822 = vpack.c.b16 %v1761, %v1760
          %v1823 = vpack.c.b16 %v1763, %v1762
          %v1824 = vpack.c.b16 %v1765, %v1764
          %v1825 = vpack.c.b16 %v1767, %v1766
          %v1826 = vpack.c.b16 %v1769, %v1768
          %v1827 = vpack.c.b16 %v1771, %v1770
          %v1828 = vpack.c.b16 %v1773, %v1772
          %v1829 = vpack.c.b16 %v1775, %v1774
          %v1830 = vpack.c.b16 %v1777, %v1776
          %v1831 = vpack.c.b16 %v1779, %v1778
          %v1832 = vpack.c.b16 %v1781, %v1780
          %v1833 = vpack.c.b16 %v1783, %v1782
          %v1834 = vpack.c.b16 %v1785, %v1784
          %v1835 = vpack.c.b16 %v1787, %v1786
          %v1836 = vpack.c.b16 %v1789, %v1788
          %v1837 = vpack.c.b16 %v1791, %v1790
          %v1838 = vpack.c.b16 %v1793, %v1792
          %v1839 = vpack.c.b16 %v1795, %v1794
          %v1840 = vpack.c.b16 %v1797, %v1796
          %v1841 = vpack.c.b16 %v1799, %v1798
          %v1842 = vpack.c.b16 %v1801, %v1800
          %v1843 = vpack.c.b16 %v1803, %v1802
          %v1844 = vpack.c.b16 %v1805, %v1804
          %v1845 = vpack.c.b16 %v1807, %v1806
          %v1846 = vpack.c.b16 %v1809, %v1808
          %v1847 = vpack.c.b16 %v1811, %v1810
          %v1848 = vpack.c.b16 %v1813, %v1812
          %v1849 = vpack.c.b16 %v1815, %v1814
          %v1850 = vpack.c.b16 %v1817, %v1816
          %v1851 = vpack.c.b16 %v1819, %v1818
          %1884 = vmatpush.bf16.msra.mxu0 %v1827
          %1885 = vmatpush.bf16.msra.mxu0 %v1826
          %1886 = vmatpush.bf16.msra.mxu0 %v1825
          %1887 = vmatpush.bf16.msra.mxu0 %v1824
          %1888 = vmatpush.bf16.msra.mxu0 %v1823
          %1889 = vmatpush.bf16.msra.mxu0 %v1822
          %1890 = vmatpush.bf16.msra.mxu0 %v1821
          %1891 = vmatpush.bf16.msra.mxu0 %v1820
          %1892 = vmatmul.bf16.gmra.mxu0 %v1620
          %v1893 = vpop.f32.mrf.mxu0
          %v1894 = vadd.f32 %v1690, %v1893
          %v1895 = vpop.f32.mrf.mxu0
          %1896 = vdwg.mxu0
          %1897 = vmatpush.bf16.msra.mxu0 %v1835
          %1898 = vmatpush.bf16.msra.mxu0 %v1834
          %1899 = vmatpush.bf16.msra.mxu0 %v1833
          %1900 = vmatpush.bf16.msra.mxu0 %v1832
          %1901 = vmatpush.bf16.msra.mxu0 %v1831
          %1902 = vmatpush.bf16.msra.mxu0 %v1830
          %1903 = vmatpush.bf16.msra.mxu0 %v1829
          %1904 = vmatpush.bf16.msra.mxu0 %v1828
          %1905 = vmatmul.bf16.gmra.mxu0 %v1621
          %v1906 = vpop.f32.mrf.mxu0
          %v1907 = vadd.f32 %v1894, %v1906
          %v1908 = vpop.f32.mrf.mxu0
          %1909 = vdwg.mxu0
          %1910 = vmatpush.bf16.msra.mxu0 %v1843
          %1911 = vmatpush.bf16.msra.mxu0 %v1842
          %1912 = vmatpush.bf16.msra.mxu0 %v1841
          %1913 = vmatpush.bf16.msra.mxu0 %v1840
          %1914 = vmatpush.bf16.msra.mxu0 %v1839
          %1915 = vmatpush.bf16.msra.mxu0 %v1838
          %1916 = vmatpush.bf16.msra.mxu0 %v1837
          %1917 = vmatpush.bf16.msra.mxu0 %v1836
          %1918 = vmatmul.bf16.gmra.mxu0 %v1622
          %v1919 = vpop.f32.mrf.mxu0
          %v1920 = vadd.f32 %v1907, %v1919
          %v1921 = vpop.f32.mrf.mxu0
          %1922 = vdwg.mxu0
          %1923 = vmatpush.bf16.msra.mxu0 %v1851
          %1924 = vmatpush.bf16.msra.mxu0 %v1850
          %1925 = vmatpush.bf16.msra.mxu0 %v1849
          %1926 = vmatpush.bf16.msra.mxu0 %v1848
          %1927 = vmatpush.bf16.msra.mxu0 %v1847
          %1928 = vmatpush.bf16.msra.mxu0 %v1846
          %1929 = vmatpush.bf16.msra.mxu0 %v1845
          %1930 = vmatpush.bf16.msra.mxu0 %v1844
          %1931 = vmatmul.bf16.gmra.mxu0 %v1623
          %v1932 = vpop.f32.mrf.mxu0
          %v1933 = vadd.f32 %v1920, %v1932
          %v1934 = vpop.f32.mrf.mxu0
          %1935 = vdwg.mxu0
          %1936 = vst [vmem:[%s541] sm:$0xff] %v1933
        $region125: #{tpu_custom_call.1} parent=96 // pred_fallthru
          _
        %s1937 = sand.u32 %s264, 1
        %s1938 = scalar_lea.sflag [#allocation6], %s1937
        %s1939 = sand.u32 %s264, 1
        %s1940 = smul.addr %s1939, 8
        %s1941 = scalar_lea.vmem [#allocation12], %s1940
        // Predicated region
        $region126: #{tpu_custom_call.1} parent=96 // pred_check
          %p1942 = pneg %p274
        $region127: #{tpu_custom_call.1} parent=96 // pred_check_branch
          %1944 = sbr.rel (%p1942) target = $region129
        $region128: #{tpu_custom_call.1} parent=96 // pred_region
          %1946 = vsyncadd %s1938, 0
          %s1947 = smul.addr %s31, 8
          %s1948 = scalar_lea.hbm %s10, %s1947
          %s1950 = sshll.u32 %s1941, 4
          %s1951 = int_to_ptr.vmem [resolvable:$true] %s1950
          %s1952 = sshll.u32 %s1948, 4
          %s1953 = int_to_ptr.hbm [resolvable:$true] %s1952
          %1955 = dma.vmem_to_hbm [thread:$0]  %s1951, 128, %s1953, %s1938
        $region129: #{tpu_custom_call.1} parent=96 // pred_fallthru
          _
      $region97: #{tpu_custom_call.1} parent=5 // pred_fallthru
        _
      %p1956 = scmp.le.s32.totalorder 2, %s22
      // Predicated region
      $region130: #{tpu_custom_call.1} parent=5 // pred_check
        %p1957 = pneg %p1956
      $region131: #{tpu_custom_call.1} parent=5 // pred_check_branch
        %1959 = sbr.rel (%p1957) target = $region133
      $region132: #{tpu_custom_call.1} parent=5 // pred_region
        %s1960 = ssub.s32 %s22, 2
        // Predicated region
        $region134: #{tpu_custom_call.1} parent=132 // pred_check
          %p1961 = pneg %p280
        $region135: #{tpu_custom_call.1} parent=132 // pred_check_branch
          %1963 = sbr.rel (%p1961) target = $region137
        $region136: #{tpu_custom_call.1} parent=132 // pred_region
          %s1964 = sand.u32 %s265, 1
          %s1965 = scalar_lea.sflag [#allocation6], %s1964
          %s1966 = sand.u32 %s265, 1
          %s1967 = smul.addr %s1966, 8
          %s1968 = scalar_lea.vmem [#allocation12], %s1967
          %1970 = dma.done %s1965, 128
        $region137: #{tpu_custom_call.1} parent=132 // pred_fallthru
          _
      $region133: #{tpu_custom_call.1} parent=5 // pred_fallthru
        _
    $region6: #{tpu_custom_call.1} parent=1 // loop_footer
      %s26 = sadd.s32 1, %s22
    $region7: #{tpu_custom_call.1} parent=1 // loop_footer_branch
      %21 = sbr.rel target = $region3
    $region8: #{tpu_custom_call.1} parent=1 // loop_exit
      _
    %1971 = vsyncpa [#allocation5], 1
    %s1972 = scalar_lea.sflag [#allocation5], 1
    %1973 = vsyncpa %s1972, 1
    %1974 = vsyncpa [#allocation8], 1
    %1975 = vsyncpa [#allocation11], 1
    %1976 = vsyncpa [#allocation6], 1
    %s1977 = scalar_lea.sflag [#allocation6], 1
    %1978 = vsyncpa %s1977, 1

</llo_original>
